<compile_context>
chip_gen: v7x
topology: tpu7x:2x2x1
jax: 0.10.0
libtpu: 0.0.40
codegen_flags: <defaults>
</compile_context>

<pallas_src>
import functools

import numpy as np
import jax
import jax.numpy as jnp
from jax import lax
from jax.experimental import pallas as pl
from jax.experimental.pallas import tpu as pltpu


# ---------------------------------------------------------------------------
# Pallas kernel: full time recurrence for one batch element (grid = (B,)).
# ---------------------------------------------------------------------------
def _convlstm_seq_kernel(gx_ref, wh_ref, mask_ref,      # inputs
                         h_out_ref, c_out_ref,          # outputs
                         patch_scr,                     # VMEM scratch
                         *, KH, KW, H, W, hid, T):
    # gx_ref   : (T, 4*hid, H*W) f32   precomputed conv(x, W_x) + bias, channel-major
    # wh_ref   : (4*hid, K)      bf16  h-tap weights, K = KH*KW*hid, col = tap*hid + c
    # mask_ref : (KH*KW, 1, H*W) f32   0/1 boundary mask per tap
    # h_out_ref: (T, hid, H*W)   f32   per-step hidden states
    # c_out_ref: (hid, H*W)      f32   final cell state
    # patch_scr: (K, H*W)        bf16  im2col patch (tap-major rows, lane-dense)
    HW = H * W
    ph, pw = KH // 2, KW // 2

    def step(t, carry):
        h, c = carry                                    # (hid, HW) f32 each

        # --- build the h-tap patch: rolled + masked copies of h -------------
        k = 0
        for kh in range(KH):
            for kw in range(KW):
                dh, dw = kh - ph, kw - pw
                if dh == 0 and dw == 0:
                    tap = h
                else:
                    s = dh * W + dw                     # want tap[p] = h[p + s]
                    tap = pltpu.roll(h, (-s) % HW, axis=1) * mask_ref[k]
                # aligned (hid, HW) slab store (sublane offset multiple of 8)
                patch_scr[k * hid:(k + 1) * hid, :] = tap.astype(patch_scr.dtype)
                k += 1

        # --- one big-K MXU matmul (bf16 x bf16 -> f32) + hoisted x gates ----
        gates = jnp.dot(wh_ref[...], patch_scr[...],
                        preferred_element_type=jnp.float32)       # (4*hid, HW)
        gates = gates + gx_ref[t]

        # The reference module applies sigmoid to all four gates (incl. g).
        a = jax.nn.sigmoid(gates)
        i = a[0 * hid:1 * hid]
        f = a[1 * hid:2 * hid]
        o = a[2 * hid:3 * hid]
        g = a[3 * hid:4 * hid]

        c_next = f * c + i * g
        h_next = o * jnp.tanh(c_next)
        h_out_ref[t] = h_next
        return h_next, c_next

    zeros = jnp.zeros((hid, HW), jnp.float32)
    _, c_last = lax.fori_loop(0, T, step, (zeros, zeros))
    c_out_ref[...] = c_last


# ---------------------------------------------------------------------------
# Hoisted (non-recurrent) half of the gate conv: conv(x, W_x) + bias for all
# frames at once, output channel-major (B, T, 4*hid, H*W).
# ---------------------------------------------------------------------------
def _input_gates(x_cm, w_x, bias):
    B, T, Cx, H, W = x_cm.shape
    C4 = w_x.shape[-1]
    xb = x_cm.reshape(B * T, Cx, H, W).astype(jnp.bfloat16)
    out = lax.conv_general_dilated(
        xb, w_x.astype(jnp.bfloat16), window_strides=(1, 1), padding="SAME",
        dimension_numbers=("NCHW", "HWIO", "NCHW"),
        preferred_element_type=jnp.float32)                       # (B*T, C4, H, W)
    out = out + bias.astype(jnp.float32)[None, :, None, None]
    return out.reshape(B, T, C4, H * W)


# ---------------------------------------------------------------------------
# Wrapper: one ConvLSTM layer over the full (B, T) sequence.
# ---------------------------------------------------------------------------
def convlstm_layer(x_cm, w_hwio, bias, hid, kernel_size):
    """x_cm: (B, T, Cx, H, W) f32.  Returns (h_seq (B,T,hid,H*W), c_last (B,hid,H*W))."""
    B, T, Cx, H, W = x_cm.shape
    KH, KW = kernel_size
    # TODO(synk): even kernel sizes (PyTorch padding=k//2 asymmetry) unsupported.
    assert KH % 2 == 1 and KW % 2 == 1, "odd kernel sizes only"
    HW = H * W
    C4 = 4 * hid
    K = KH * KW * hid
    ph, pw = KH // 2, KW // 2
    assert w_hwio.shape == (KH, KW, Cx + hid, C4)
    # TODO(synk): for large H*W / hid, tile over H*W and set vmem_limit_bytes;
    # the lane-dense layout below assumes these shapes fit VMEM comfortably.
    assert HW % 128 == 0 and hid % 8 == 0, "lane/sublane-dense layout assumptions"

    # Hoisted x half of the conv (+ bias), done once for all (B, T) frames.
    gx = _input_gates(x_cm, w_hwio[:, :, :Cx, :], bias)           # (B,T,C4,HW) f32

    # Recurrent (h-tap) weights flattened so gates_h = W_hm @ patch with patch
    # rows ordered (tap, channel); cast once to bf16 for the MXU.
    w_hm = w_hwio[:, :, Cx:, :].reshape(K, C4).T.astype(jnp.bfloat16)   # (C4, K)

    # 0/1 boundary masks per tap over the flattened H*W axis (zero wherever the
    # rolled tap would read across an image border / wrap around).
    yy = np.repeat(np.arange(H), W)
    xx = np.tile(np.arange(W), H)
    rows = []
    for kh in range(KH):
        for kw in range(KW):
            dh, dw = kh - ph, kw - pw
            rows.append(((yy + dh >= 0) & (yy + dh < H) &
                         (xx + dw >= 0) & (xx + dw < W)).astype(np.float32))
    masks = jnp.asarray(np.stack(rows, axis=0)).reshape(KH * KW, 1, HW)

    kernel = functools.partial(_convlstm_seq_kernel,
                               KH=KH, KW=KW, H=H, W=W, hid=hid, T=T)

    h_seq, c_last = pl.pallas_call(
        kernel,
        out_shape=(jax.ShapeDtypeStruct((B, T, hid, HW), jnp.float32),
                   jax.ShapeDtypeStruct((B, hid, HW), jnp.float32)),
        grid=(B,),
        in_specs=[
            # whole-T precomputed x-gates block for this batch element
            pl.BlockSpec((None, T, C4, HW), lambda b: (b, 0, 0, 0)),
            # weights & masks: constant index -> DMA'd once, VMEM-resident
            pl.BlockSpec((C4, K), lambda b: (0, 0)),
            pl.BlockSpec((KH * KW, 1, HW), lambda b: (0, 0, 0)),
        ],
        out_specs=(
            pl.BlockSpec((None, T, hid, HW), lambda b: (b, 0, 0, 0)),
            pl.BlockSpec((None, hid, HW), lambda b: (b, 0, 0)),
        ),
        scratch_shapes=[pltpu.VMEM((K, HW), jnp.bfloat16)],       # im2col patch
        compiler_params=pltpu.CompilerParams(
            dimension_semantics=("parallel",)),                   # v7x: 1 batch / core
    )(gx, w_hm, masks)
    return h_seq, c_last


# ---------------------------------------------------------------------------
# Full ConvLSTM forward (PyTorch-layout in/out; layer loop is glue).
# ---------------------------------------------------------------------------
def conv_lstm_forward(x, params, hidden_sizes, kernel_sizes):
    """x: (B, T, C, H, W) f32.  Returns (layer_output_list, last_state_list)
    in the PyTorch convention: outputs (B,T,hid,H,W), states ((B,hid,H,W),...)."""
    B, T, C, H, W = x.shape
    cur = x
    layer_output_list, last_state_list = [], []
    for li, (w_hwio, bias) in enumerate(params):
        hid = hidden_sizes[li]
        h_seq, c_last = convlstm_layer(cur, w_hwio, bias, hid, kernel_sizes[li])
        seq = h_seq.reshape(B, T, hid, H, W)                      # already channel-major
        layer_output_list.append(seq)
        last_state_list.append((seq[:, -1], c_last.reshape(B, hid, H, W)))
        cur = seq
    return layer_output_list, last_state_list


# ---------------------------------------------------------------------------
# Pure-JAX reference (same bf16-operand / f32-accumulate conv as the kernel;
# sigmoid on all four gates, matching the reference module).
# ---------------------------------------------------------------------------
def _ref_forward(x, params, hidden_sizes, kernel_sizes):
    B, T, C, H, W = x.shape
    cur = x
    layer_output_list, last_state_list = [], []
    for li, (w_hwio, bias) in enumerate(params):
        hid = hidden_sizes[li]
        wb = w_hwio.astype(jnp.bfloat16)
        h = jnp.zeros((B, hid, H, W), jnp.float32)
        c = jnp.zeros((B, hid, H, W), jnp.float32)
        outs = []
        for t in range(T):
            comb = jnp.concatenate([cur[:, t], h], axis=1).astype(jnp.bfloat16)
            cc = lax.conv_general_dilated(
                comb, wb, (1, 1), "SAME",
                dimension_numbers=("NCHW", "HWIO", "NCHW"),
                preferred_element_type=jnp.float32)
            cc = cc + bias[None, :, None, None]
            i = jax.nn.sigmoid(cc[:, 0 * hid:1 * hid])
            f = jax.nn.sigmoid(cc[:, 1 * hid:2 * hid])
            o = jax.nn.sigmoid(cc[:, 2 * hid:3 * hid])
            g = jax.nn.sigmoid(cc[:, 3 * hid:4 * hid])            # sigmoid, per module
            c = f * c + i * g
            h = o * jnp.tanh(c)
            outs.append(h)
        seq = jnp.stack(outs, axis=1)
        layer_output_list.append(seq)
        last_state_list.append((h, c))
        cur = seq
    return layer_output_list, last_state_list


if __name__ == "__main__":
    # Small deterministic problem: B=2, T=8, C=4, H=W=16, hidden=32, 2 layers, 3x3.
    B, T, C, H, W = 2, 8, 4, 16, 16
    hidden_size, num_layers = 32, 2
    hidden_sizes = [hidden_size] * num_layers
    kernel_sizes = [(3, 3)] * num_layers

    key = jax.random.PRNGKey(0)
    kx, *kp = jax.random.split(key, 1 + 2 * num_layers)
    x = jax.random.normal(kx, (B, T, C, H, W), dtype=jnp.float32)

    # Deterministic conv parameters in HWIO layout (KH, KW, Cin, 4*Hid)
    # (PyTorch layout would be (4*Hid, Cin, KH, KW)).
    params = []
    for li in range(num_layers):
        cin = (C if li == 0 else hidden_sizes[li - 1]) + hidden_sizes[li]
        kh, kw = kernel_sizes[li]
        w = 0.1 * jax.random.normal(kp[2 * li], (kh, kw, cin, 4 * hidden_sizes[li]),
                                    dtype=jnp.float32)
        b = 0.1 * jax.random.normal(kp[2 * li + 1], (4 * hidden_sizes[li],),
                                    dtype=jnp.float32)
        params.append((w, b))

    layer_outputs, last_states = conv_lstm_forward(x, params, hidden_sizes, kernel_sizes)
    jax.block_until_ready(layer_outputs)
    jax.block_until_ready(last_states)

    # Sanity check against a pure-JAX reference of the same math.
    ref_outputs, ref_states = _ref_forward(x, params, hidden_sizes, kernel_sizes)
    for a, b in zip(layer_outputs, ref_outputs):
        np.testing.assert_allclose(np.asarray(a), np.asarray(b), rtol=2e-3, atol=2e-3)
    for (ha, ca), (hb, cb) in zip(last_states, ref_states):
        np.testing.assert_allclose(np.asarray(ha), np.asarray(hb), rtol=2e-3, atol=2e-3)
        np.testing.assert_allclose(np.asarray(ca), np.asarray(cb), rtol=2e-3, atol=2e-3)

    print("KERNEL_OK")
</pallas_src>

<mosaic_0001>
module attributes {stable_mosaic.version = 11 : i64} {
  func.func @_convlstm_seq_kernel(%arg0: i32, %arg1: memref<1x8x128x256xf32, #tpu.memory_space<vmem>>, %arg2: memref<128x288xbf16, #tpu.memory_space<vmem>>, %arg3: memref<9x1x256xf32, #tpu.memory_space<vmem>>, %arg4: memref<1x8x32x256xf32, #tpu.memory_space<vmem>>, %arg5: memref<1x32x256xf32, #tpu.memory_space<vmem>>, %arg6: memref<288x256xbf16, #tpu.memory_space<vmem>>) attributes {dimension_semantics = [#tpu.dimension_semantics<parallel>], iteration_bounds = array<i64: 2>, scalar_prefetch = 0 : i64, scratch_operands = 1 : i64, tpu.core_type = #tpu.core_type<tc>, window_params = [{transform_indices = @transform_0, window_bounds = array<i64: 1, 8, 128, 256>}, {pipeline_mode = #tpu.pipeline_mode<synchronous>, transform_indices = @transform_1, window_bounds = array<i64: 128, 288>}, {pipeline_mode = #tpu.pipeline_mode<synchronous>, transform_indices = @transform_2, window_bounds = array<i64: 9, 1, 256>}, {transform_indices = @transform_3, window_bounds = array<i64: 1, 8, 32, 256>}, {transform_indices = @transform_4, window_bounds = array<i64: 1, 32, 256>}]} {
    %cst = arith.constant 0.000000e+00 : f32
    %0 = vector.broadcast %cst : f32 to vector<32x256xf32>
    %c0_i32 = arith.constant 0 : i32
    %c8_i32 = arith.constant 8 : i32
    %1 = arith.addi %c0_i32, %c8_i32 : i32
    %c1_i32 = arith.constant 1 : i32
    %2:2 = scf.for %arg7 = %c0_i32 to %1 step %c1_i32 iter_args(%arg8 = %0, %arg9 = %0) -> (vector<32x256xf32>, vector<32x256xf32>)  : i32 {
      %c17_i32 = arith.constant 17 : i32
      %6 = tpu.dynamic_rotate %arg8 by %c17_i32 dim 1 : vector<32x256xf32>, i32 -> vector<32x256xf32>
      %c0_3 = arith.constant 0 : index
      %c0_4 = arith.constant 0 : index
      %c0_5 = arith.constant 0 : index
      %7 = vector.load %arg3[%c0_3, %c0_4, %c0_5] : memref<9x1x256xf32, #tpu.memory_space<vmem>>, vector<1x1x256xf32>
      %8 = vector.shape_cast %7 : vector<1x1x256xf32> to vector<1x256xf32>
      %9 = vector.broadcast %8 : vector<1x256xf32> to vector<32x256xf32>
      %10 = arith.mulf %6, %9 : vector<32x256xf32>
      %11 = arith.truncf %10 : vector<32x256xf32> to vector<32x256xbf16>
      %c0_6 = arith.constant 0 : index
      %c0_7 = arith.constant 0 : index
      %12 = vector.load %arg6[%c0_6, %c0_7] : memref<288x256xbf16, #tpu.memory_space<vmem>>, vector<32x256xbf16>
      tpu.vector_store %arg6[%c0_6, %c0_7], %11 {strides = array<i32>} : memref<288x256xbf16, #tpu.memory_space<vmem>>, vector<32x256xbf16>,
      %c16_i32 = arith.constant 16 : i32
      %13 = tpu.dynamic_rotate %arg8 by %c16_i32 dim 1 : vector<32x256xf32>, i32 -> vector<32x256xf32>
      %c1 = arith.constant 1 : index
      %c0_8 = arith.constant 0 : index
      %c0_9 = arith.constant 0 : index
      %14 = vector.load %arg3[%c1, %c0_8, %c0_9] : memref<9x1x256xf32, #tpu.memory_space<vmem>>, vector<1x1x256xf32>
      %15 = vector.shape_cast %14 : vector<1x1x256xf32> to vector<1x256xf32>
      %16 = vector.broadcast %15 : vector<1x256xf32> to vector<32x256xf32>
      %17 = arith.mulf %13, %16 : vector<32x256xf32>
      %18 = arith.truncf %17 : vector<32x256xf32> to vector<32x256xbf16>
      %c32 = arith.constant 32 : index
      %c0_10 = arith.constant 0 : index
      %19 = vector.load %arg6[%c32, %c0_10] : memref<288x256xbf16, #tpu.memory_space<vmem>>, vector<32x256xbf16>
      tpu.vector_store %arg6[%c32, %c0_10], %18 {strides = array<i32>} : memref<288x256xbf16, #tpu.memory_space<vmem>>, vector<32x256xbf16>,
      %c15_i32 = arith.constant 15 : i32
      %20 = tpu.dynamic_rotate %arg8 by %c15_i32 dim 1 : vector<32x256xf32>, i32 -> vector<32x256xf32>
      %c2 = arith.constant 2 : index
      %c0_11 = arith.constant 0 : index
      %c0_12 = arith.constant 0 : index
      %21 = vector.load %arg3[%c2, %c0_11, %c0_12] : memref<9x1x256xf32, #tpu.memory_space<vmem>>, vector<1x1x256xf32>
      %22 = vector.shape_cast %21 : vector<1x1x256xf32> to vector<1x256xf32>
      %23 = vector.broadcast %22 : vector<1x256xf32> to vector<32x256xf32>
      %24 = arith.mulf %20, %23 : vector<32x256xf32>
      %25 = arith.truncf %24 : vector<32x256xf32> to vector<32x256xbf16>
      %c64 = arith.constant 64 : index
      %c0_13 = arith.constant 0 : index
      %26 = vector.load %arg6[%c64, %c0_13] : memref<288x256xbf16, #tpu.memory_space<vmem>>, vector<32x256xbf16>
      tpu.vector_store %arg6[%c64, %c0_13], %25 {strides = array<i32>} : memref<288x256xbf16, #tpu.memory_space<vmem>>, vector<32x256xbf16>,
      %c1_i32_14 = arith.constant 1 : i32
      %27 = tpu.dynamic_rotate %arg8 by %c1_i32_14 dim 1 : vector<32x256xf32>, i32 -> vector<32x256xf32>
      %c3 = arith.constant 3 : index
      %c0_15 = arith.constant 0 : index
      %c0_16 = arith.constant 0 : index
      %28 = vector.load %arg3[%c3, %c0_15, %c0_16] : memref<9x1x256xf32, #tpu.memory_space<vmem>>, vector<1x1x256xf32>
      %29 = vector.shape_cast %28 : vector<1x1x256xf32> to vector<1x256xf32>
      %30 = vector.broadcast %29 : vector<1x256xf32> to vector<32x256xf32>
      %31 = arith.mulf %27, %30 : vector<32x256xf32>
      %32 = arith.truncf %31 : vector<32x256xf32> to vector<32x256xbf16>
      %c96 = arith.constant 96 : index
      %c0_17 = arith.constant 0 : index
      %33 = vector.load %arg6[%c96, %c0_17] : memref<288x256xbf16, #tpu.memory_space<vmem>>, vector<32x256xbf16>
      tpu.vector_store %arg6[%c96, %c0_17], %32 {strides = array<i32>} : memref<288x256xbf16, #tpu.memory_space<vmem>>, vector<32x256xbf16>,
      %34 = arith.truncf %arg8 : vector<32x256xf32> to vector<32x256xbf16>
      %c128 = arith.constant 128 : index
      %c0_18 = arith.constant 0 : index
      %35 = vector.load %arg6[%c128, %c0_18] : memref<288x256xbf16, #tpu.memory_space<vmem>>, vector<32x256xbf16>
      tpu.vector_store %arg6[%c128, %c0_18], %34 {strides = array<i32>} : memref<288x256xbf16, #tpu.memory_space<vmem>>, vector<32x256xbf16>,
      %c255_i32 = arith.constant 255 : i32
      %36 = tpu.dynamic_rotate %arg8 by %c255_i32 dim 1 : vector<32x256xf32>, i32 -> vector<32x256xf32>
      %c5 = arith.constant 5 : index
      %c0_19 = arith.constant 0 : index
      %c0_20 = arith.constant 0 : index
      %37 = vector.load %arg3[%c5, %c0_19, %c0_20] : memref<9x1x256xf32, #tpu.memory_space<vmem>>, vector<1x1x256xf32>
      %38 = vector.shape_cast %37 : vector<1x1x256xf32> to vector<1x256xf32>
      %39 = vector.broadcast %38 : vector<1x256xf32> to vector<32x256xf32>
      %40 = arith.mulf %36, %39 : vector<32x256xf32>
      %41 = arith.truncf %40 : vector<32x256xf32> to vector<32x256xbf16>
      %c160 = arith.constant 160 : index
      %c0_21 = arith.constant 0 : index
      %42 = vector.load %arg6[%c160, %c0_21] : memref<288x256xbf16, #tpu.memory_space<vmem>>, vector<32x256xbf16>
      tpu.vector_store %arg6[%c160, %c0_21], %41 {strides = array<i32>} : memref<288x256xbf16, #tpu.memory_space<vmem>>, vector<32x256xbf16>,
      %c241_i32 = arith.constant 241 : i32
      %43 = tpu.dynamic_rotate %arg8 by %c241_i32 dim 1 : vector<32x256xf32>, i32 -> vector<32x256xf32>
      %c6 = arith.constant 6 : index
      %c0_22 = arith.constant 0 : index
      %c0_23 = arith.constant 0 : index
      %44 = vector.load %arg3[%c6, %c0_22, %c0_23] : memref<9x1x256xf32, #tpu.memory_space<vmem>>, vector<1x1x256xf32>
      %45 = vector.shape_cast %44 : vector<1x1x256xf32> to vector<1x256xf32>
      %46 = vector.broadcast %45 : vector<1x256xf32> to vector<32x256xf32>
      %47 = arith.mulf %43, %46 : vector<32x256xf32>
      %48 = arith.truncf %47 : vector<32x256xf32> to vector<32x256xbf16>
      %c192 = arith.constant 192 : index
      %c0_24 = arith.constant 0 : index
      %49 = vector.load %arg6[%c192, %c0_24] : memref<288x256xbf16, #tpu.memory_space<vmem>>, vector<32x256xbf16>
      tpu.vector_store %arg6[%c192, %c0_24], %48 {strides = array<i32>} : memref<288x256xbf16, #tpu.memory_space<vmem>>, vector<32x256xbf16>,
      %c240_i32 = arith.constant 240 : i32
      %50 = tpu.dynamic_rotate %arg8 by %c240_i32 dim 1 : vector<32x256xf32>, i32 -> vector<32x256xf32>
      %c7 = arith.constant 7 : index
      %c0_25 = arith.constant 0 : index
      %c0_26 = arith.constant 0 : index
      %51 = vector.load %arg3[%c7, %c0_25, %c0_26] : memref<9x1x256xf32, #tpu.memory_space<vmem>>, vector<1x1x256xf32>
      %52 = vector.shape_cast %51 : vector<1x1x256xf32> to vector<1x256xf32>
      %53 = vector.broadcast %52 : vector<1x256xf32> to vector<32x256xf32>
      %54 = arith.mulf %50, %53 : vector<32x256xf32>
      %55 = arith.truncf %54 : vector<32x256xf32> to vector<32x256xbf16>
      %c224 = arith.constant 224 : index
      %c0_27 = arith.constant 0 : index
      %56 = vector.load %arg6[%c224, %c0_27] : memref<288x256xbf16, #tpu.memory_space<vmem>>, vector<32x256xbf16>
      tpu.vector_store %arg6[%c224, %c0_27], %55 {strides = array<i32>} : memref<288x256xbf16, #tpu.memory_space<vmem>>, vector<32x256xbf16>,
      %c239_i32 = arith.constant 239 : i32
      %57 = tpu.dynamic_rotate %arg8 by %c239_i32 dim 1 : vector<32x256xf32>, i32 -> vector<32x256xf32>
      %c8 = arith.constant 8 : index
      %c0_28 = arith.constant 0 : index
      %c0_29 = arith.constant 0 : index
      %58 = vector.load %arg3[%c8, %c0_28, %c0_29] : memref<9x1x256xf32, #tpu.memory_space<vmem>>, vector<1x1x256xf32>
      %59 = vector.shape_cast %58 : vector<1x1x256xf32> to vector<1x256xf32>
      %60 = vector.broadcast %59 : vector<1x256xf32> to vector<32x256xf32>
      %61 = arith.mulf %57, %60 : vector<32x256xf32>
      %62 = arith.truncf %61 : vector<32x256xf32> to vector<32x256xbf16>
      %c256 = arith.constant 256 : index
      %c0_30 = arith.constant 0 : index
      %63 = vector.load %arg6[%c256, %c0_30] : memref<288x256xbf16, #tpu.memory_space<vmem>>, vector<32x256xbf16>
      tpu.vector_store %arg6[%c256, %c0_30], %62 {strides = array<i32>} : memref<288x256xbf16, #tpu.memory_space<vmem>>, vector<32x256xbf16>,
      %c0_31 = arith.constant 0 : index
      %c0_32 = arith.constant 0 : index
      %64 = vector.load %arg2[%c0_31, %c0_32] : memref<128x288xbf16, #tpu.memory_space<vmem>>, vector<128x288xbf16>
      %c0_33 = arith.constant 0 : index
      %c0_34 = arith.constant 0 : index
      %65 = vector.load %arg6[%c0_33, %c0_34] : memref<288x256xbf16, #tpu.memory_space<vmem>>, vector<288x256xbf16>
      %cst_35 = arith.constant dense<0.000000e+00> : vector<128x256xf32>
      %66 = tpu.matmul %64, %65, %cst_35 {dimension_numbers = #tpu.dot_dimension_numbers<[1], [0], [0], [1], [0, 0, 1, 1], [], []>} : vector<128x288xbf16>, vector<288x256xbf16>, vector<128x256xf32> -> vector<128x256xf32>
      %c0_36 = arith.constant 0 : index
      %67 = arith.index_cast %arg7 : i32 to index
      %c0_37 = arith.constant 0 : index
      %c0_38 = arith.constant 0 : index
      %68 = vector.load %arg1[%c0_36, %67, %c0_37, %c0_38] : memref<1x8x128x256xf32, #tpu.memory_space<vmem>>, vector<1x1x128x256xf32>
      %69 = vector.shape_cast %68 : vector<1x1x128x256xf32> to vector<128x256xf32>
      %70 = arith.addf %66, %69 : vector<128x256xf32>
      %71 = arith.negf %70 : vector<128x256xf32>
      %72 = math.exp %71 : vector<128x256xf32>
      %cst_39 = arith.constant 1.000000e+00 : f32
      %73 = vector.broadcast %cst_39 : f32 to vector<128x256xf32>
      %74 = arith.addf %73, %72 : vector<128x256xf32>
      %75 = arith.divf %73, %74 : vector<128x256xf32>
      %76 = vector.extract_strided_slice %75 {offsets = [0, 0], sizes = [32, 256], strides = [1, 1]} : vector<128x256xf32> to vector<32x256xf32>
      %77 = vector.extract_strided_slice %75 {offsets = [32, 0], sizes = [32, 256], strides = [1, 1]} : vector<128x256xf32> to vector<32x256xf32>
      %78 = vector.extract_strided_slice %75 {offsets = [64, 0], sizes = [32, 256], strides = [1, 1]} : vector<128x256xf32> to vector<32x256xf32>
      %79 = vector.extract_strided_slice %75 {offsets = [96, 0], sizes = [32, 256], strides = [1, 1]} : vector<128x256xf32> to vector<32x256xf32>
      %80 = arith.mulf %77, %arg9 : vector<32x256xf32>
      %81 = arith.mulf %76, %79 : vector<32x256xf32>
      %82 = arith.addf %80, %81 : vector<32x256xf32>
      %83 = math.tanh %82 : vector<32x256xf32>
      %84 = arith.mulf %78, %83 : vector<32x256xf32>
      %c0_40 = arith.constant 0 : index
      %85 = arith.index_cast %arg7 : i32 to index
      %c0_41 = arith.constant 0 : index
      %c0_42 = arith.constant 0 : index
      %86 = vector.load %arg4[%c0_40, %85, %c0_41, %c0_42] : memref<1x8x32x256xf32, #tpu.memory_space<vmem>>, vector<1x1x32x256xf32>
      %87 = vector.shape_cast %86 : vector<1x1x32x256xf32> to vector<32x256xf32>
      %88 = vector.shape_cast %84 : vector<32x256xf32> to vector<1x1x32x256xf32>
      tpu.vector_store %arg4[%c0_40, %85, %c0_41, %c0_42], %88 {strides = array<i32>} : memref<1x8x32x256xf32, #tpu.memory_space<vmem>>, vector<1x1x32x256xf32>,
      scf.yield %84, %82 : vector<32x256xf32>, vector<32x256xf32>
    }
    %c8_i32_0 = arith.constant 8 : i32
    %c0 = arith.constant 0 : index
    %c0_1 = arith.constant 0 : index
    %c0_2 = arith.constant 0 : index
    %3 = vector.load %arg5[%c0, %c0_1, %c0_2] : memref<1x32x256xf32, #tpu.memory_space<vmem>>, vector<1x32x256xf32>
    %4 = vector.shape_cast %3 : vector<1x32x256xf32> to vector<32x256xf32>
    %5 = vector.shape_cast %2#1 : vector<32x256xf32> to vector<1x32x256xf32>
    tpu.vector_store %arg5[%c0, %c0_1, %c0_2], %5 {strides = array<i32>} : memref<1x32x256xf32, #tpu.memory_space<vmem>>, vector<1x32x256xf32>,
    return
  }
  func.func @transform_0(%arg0: i32) -> (i32, i32, i32, i32) {
    %c0_i32 = arith.constant 0 : i32
    %c0_i32_0 = arith.constant 0 : i32
    %c0_i32_1 = arith.constant 0 : i32
    %c0_i32_2 = arith.constant 0 : i32
    return %arg0, %c0_i32, %c0_i32_0, %c0_i32_1 : i32, i32, i32, i32
  }
  func.func @transform_1(%arg0: i32) -> (i32, i32) {
    %c0_i32 = arith.constant 0 : i32
    %c0_i32_0 = arith.constant 0 : i32
    %c0_i32_1 = arith.constant 0 : i32
    return %c0_i32, %c0_i32_0 : i32, i32
  }
  func.func @transform_2(%arg0: i32) -> (i32, i32, i32) {
    %c0_i32 = arith.constant 0 : i32
    %c0_i32_0 = arith.constant 0 : i32
    %c0_i32_1 = arith.constant 0 : i32
    %c0_i32_2 = arith.constant 0 : i32
    return %c0_i32, %c0_i32_0, %c0_i32_1 : i32, i32, i32
  }
  func.func @transform_3(%arg0: i32) -> (i32, i32, i32, i32) {
    %c0_i32 = arith.constant 0 : i32
    %c0_i32_0 = arith.constant 0 : i32
    %c0_i32_1 = arith.constant 0 : i32
    %c0_i32_2 = arith.constant 0 : i32
    return %arg0, %c0_i32, %c0_i32_0, %c0_i32_1 : i32, i32, i32, i32
  }
  func.func @transform_4(%arg0: i32) -> (i32, i32, i32) {
    %c0_i32 = arith.constant 0 : i32
    %c0_i32_0 = arith.constant 0 : i32
    %c0_i32_1 = arith.constant 0 : i32
    return %arg0, %c0_i32, %c0_i32_0 : i32, i32, i32
  }
}

</mosaic_0001>

<llo_original>
// kernel: tpu_custom_call.1
$region0: #{tpu_custom_call.1}
  #allocation0 [shape = 'u32[]', space=smem, size = 0x4, offset = 0x4, fixed_abs, tag = 'smem constant byte address 0x4 - core index']
  #allocation1 [shape = 'u32[144,128]{1,0:T(1,128)}', space=vmem, size = 0x12000, scoped, tag = 'internal scratch']
  #allocation2 [shape = 'bf16[288,256]{1,0:T(16,128)(2,1)}', space=vmem, size = 0x24000, scoped, tag = 'scratch operand']
  %s0 = inlined_call_operand.hbm [shape: f32[2,8,128,256], index: 0, kind: input, shape index: {}]
  %s1 = inlined_call_operand.vmem [shape: bf16[128,288], index: 1, kind: input, shape index: {}]
  %s2 = inlined_call_operand.hbm [shape: f32[9,1,256], index: 2, kind: input, shape index: {}]
  %s3 = inlined_call_operand.hbm [shape: f32[2,8,32,256], index: 3, kind: output, shape index: {0}]
  %s4 = inlined_call_operand.hbm [shape: f32[2,32,256], index: 4, kind: output, shape index: {1}]
  %5 = xla_tuple %s3, %s4
  %s6 = sld [smem:[#allocation0]]
  $region68: #{tpu_custom_call.1} parent=0
    _
  %s8 = ssub.s32 1, %s6
  %s9 = scalar_select 0, %s8, %s6
  $region1: #{tpu_custom_call.1} parent=0
    #allocation3 [shape = 'u8[2097152]{0}', space=vmem, size = 0x200000, scoped, tag = 'input window, operand 0']
    #allocation4 [shape = 's32[2]{0}', space=sflag, size = 0x8, scoped, tag = 'scoped memory for tpu_custom_call.1']
    #allocation5 [shape = 's32[2]{0}', space=sflag, size = 0x8, scoped, tag = 'scoped memory for tpu_custom_call.1']
    #allocation6 [shape = 'u8[9216]{0}', space=vmem, size = 0x2400, scoped, tag = 'input window, operand 2, single buffered']
    #allocation7 [shape = 's32[1]{0}', space=sflag, size = 0x4, scoped, tag = 'scoped memory for tpu_custom_call.1']
    #allocation8 [shape = 'u8[524288]{0}', space=vmem, size = 0x80000, scoped, tag = 'output window, operand 0']
    #allocation9 [shape = 'u8[65536]{0}', space=vmem, size = 0x10000, scoped, tag = 'output window, operand 1']
    #allocation10 [shape = 's32[2]{0}', space=sflag, size = 0x8, scoped, tag = 'scoped memory for tpu_custom_call.1']
    %10 = vsyncpa [#allocation4], 0
    %s11 = scalar_lea.sflag [#allocation4], 1
    %12 = vsyncpa %s11, 0
    %13 = vsyncpa [#allocation7], 0
    %14 = vsyncpa [#allocation5], 0
    %s15 = scalar_lea.sflag [#allocation5], 1
    %16 = vsyncpa %s15, 0
    %17 = vsyncpa [#allocation10], 0
    %s18 = scalar_lea.sflag [#allocation10], 1
    %19 = vsyncpa %s18, 0
    loop: start=0, step=1, limit=4
    $region2: #{tpu_custom_call.1} parent=1 // loop_pre_header
      _
    $region3: #{tpu_custom_call.1} parent=1 // loop_header
      %s21 = sphi 0, %s25
      %p22 = scmp.ge.s32.totalorder %s21, 4
      %s31 = sphi 0, %s33
      %s34 = sphi 0, %s31
      %s35 = sphi 0, %s34
      %s51 = sphi 0, %s35
      %s55 = sphi 0, %s55
      %s57 = sphi 0, %s55
      %s58 = sphi 0, %s57
      %s72 = sphi 0, %s58
      %s76 = sphi 0, %s76
      %s78 = sphi 0, %s76
      %s79 = sphi 0, %s78
      %s93 = sphi 0, %s79
      %s99 = sphi 0, %s101
      %s102 = sphi 0, %s99
      %s103 = sphi 0, %s102
      %s119 = sphi 0, %s103
      %s125 = sphi 0, %s127
      %s128 = sphi 0, %s125
      %s129 = sphi 0, %s128
      %s145 = sphi 0, %s129
    $region4: #{tpu_custom_call.1} parent=1 // loop_header_branch
      %24 = sbr.rel (%p22) target = $region8
    $region5: #{tpu_custom_call.1} parent=1 // loop_body
      %s26 = ssub.s32 %s21, 1
      %s27 = ssub.s32 %s21, 2
      %s28 = sadd.s32 %s21, 1
      %s29 = ssub.s32 %s21, %s28
      %p30 = scmp.eq.s32.totalorder %s29, 0
      %s32 = sadd.s32 %s31, 1
      %s33 = scalar_select %p30, %s31, %s32
      %p36 = pneg %p30
      %p37 = scmp.eq.s32.totalorder %s21, 1
      %p38 = por %p36, %p37
      %p39 = scmp.ne.s32.totalorder %s31, %s34
      %p40 = scmp.eq.s32.totalorder %s21, 0
      %p41 = por %p39, %p40
      %p42 = scmp.ne.s32.totalorder %s31, %s34
      %p43 = scmp.eq.s32.totalorder %s26, 1
      %p44 = por %p42, %p43
      %p45 = scmp.ne.s32.totalorder %s34, %s35
      %p46 = scmp.eq.s32.totalorder %s26, 0
      %p47 = por %p45, %p46
      %p48 = scmp.ne.s32.totalorder %s34, %s35
      %p49 = scmp.eq.s32.totalorder %s27, 1
      %p50 = por %p48, %p49
      %p52 = scmp.ne.s32.totalorder %s35, %s51
      %p53 = scmp.eq.s32.totalorder %s27, 0
      %p54 = por %p52, %p53
      %s56 = sadd.s32 %s55, 1
      %p59 = scmp.eq.s32.totalorder %s21, 1
      %p60 = scmp.ne.s32.totalorder %s55, %s57
      %p61 = scmp.eq.s32.totalorder %s21, 0
      %p62 = por %p60, %p61
      %p63 = scmp.ne.s32.totalorder %s55, %s57
      %p64 = scmp.eq.s32.totalorder %s26, 1
      %p65 = por %p63, %p64
      %p66 = scmp.ne.s32.totalorder %s57, %s58
      %p67 = scmp.eq.s32.totalorder %s26, 0
      %p68 = por %p66, %p67
      %p69 = scmp.ne.s32.totalorder %s57, %s58
      %p70 = scmp.eq.s32.totalorder %s27, 1
      %p71 = por %p69, %p70
      %p73 = scmp.ne.s32.totalorder %s58, %s72
      %p74 = scmp.eq.s32.totalorder %s27, 0
      %p75 = por %p73, %p74
      %s77 = sadd.s32 %s76, 1
      %p80 = scmp.eq.s32.totalorder %s21, 1
      %p81 = scmp.ne.s32.totalorder %s76, %s78
      %p82 = scmp.eq.s32.totalorder %s21, 0
      %p83 = por %p81, %p82
      %p84 = scmp.ne.s32.totalorder %s76, %s78
      %p85 = scmp.eq.s32.totalorder %s26, 1
      %p86 = por %p84, %p85
      %p87 = scmp.ne.s32.totalorder %s78, %s79
      %p88 = scmp.eq.s32.totalorder %s26, 0
      %p89 = por %p87, %p88
      %p90 = scmp.ne.s32.totalorder %s78, %s79
      %p91 = scmp.eq.s32.totalorder %s27, 1
      %p92 = por %p90, %p91
      %p94 = scmp.ne.s32.totalorder %s79, %s93
      %p95 = scmp.eq.s32.totalorder %s27, 0
      %p96 = por %p94, %p95
      %s97 = ssub.s32 %s21, %s28
      %p98 = scmp.eq.s32.totalorder %s97, 0
      %s100 = sadd.s32 %s99, 1
      %s101 = scalar_select %p98, %s99, %s100
      %p104 = pneg %p98
      %p105 = scmp.eq.s32.totalorder %s21, 1
      %p106 = por %p104, %p105
      %p107 = scmp.ne.s32.totalorder %s99, %s102
      %p108 = scmp.eq.s32.totalorder %s21, 0
      %p109 = por %p107, %p108
      %p110 = scmp.ne.s32.totalorder %s99, %s102
      %p111 = scmp.eq.s32.totalorder %s26, 1
      %p112 = por %p110, %p111
      %p113 = scmp.ne.s32.totalorder %s102, %s103
      %p114 = scmp.eq.s32.totalorder %s26, 0
      %p115 = por %p113, %p114
      %p116 = scmp.ne.s32.totalorder %s102, %s103
      %p117 = scmp.eq.s32.totalorder %s27, 1
      %p118 = por %p116, %p117
      %p120 = scmp.ne.s32.totalorder %s103, %s119
      %p121 = scmp.eq.s32.totalorder %s27, 0
      %p122 = por %p120, %p121
      %s123 = ssub.s32 %s21, %s28
      %p124 = scmp.eq.s32.totalorder %s123, 0
      %s126 = sadd.s32 %s125, 1
      %s127 = scalar_select %p124, %s125, %s126
      %p130 = pneg %p124
      %p131 = scmp.eq.s32.totalorder %s21, 1
      %p132 = por %p130, %p131
      %p133 = scmp.ne.s32.totalorder %s125, %s128
      %p134 = scmp.eq.s32.totalorder %s21, 0
      %p135 = por %p133, %p134
      %p136 = scmp.ne.s32.totalorder %s125, %s128
      %p137 = scmp.eq.s32.totalorder %s26, 1
      %p138 = por %p136, %p137
      %p139 = scmp.ne.s32.totalorder %s128, %s129
      %p140 = scmp.eq.s32.totalorder %s26, 0
      %p141 = por %p139, %p140
      %p142 = scmp.ne.s32.totalorder %s128, %s129
      %p143 = scmp.eq.s32.totalorder %s27, 1
      %p144 = por %p142, %p143
      %p146 = scmp.ne.s32.totalorder %s129, %s145
      %p147 = scmp.eq.s32.totalorder %s27, 0
      %p148 = por %p146, %p147
      %p149 = scmp.le.s32.totalorder 1, %s21
      %p150 = scmp.lt.s32.totalorder %s21, 3
      %p151 = pnand %p149, %p150
      %p152 = pneg %p151
      // Predicated region
      $region9: #{tpu_custom_call.1} parent=5 // pred_check
        _
      $region10: #{tpu_custom_call.1} parent=5 // pred_check_branch
        %154 = sbr.rel (%p151) target = $region12
      $region11: #{tpu_custom_call.1} parent=5 // pred_region
        %s155 = ssub.s32 %s21, 1
        // Predicated region
        $region13: #{tpu_custom_call.1} parent=11 // pred_check
          %p156 = pneg %p68
        $region14: #{tpu_custom_call.1} parent=11 // pred_check_branch
          %158 = sbr.rel (%p156) target = $region16
        $region15: #{tpu_custom_call.1} parent=11 // pred_region
          _
        $region16: #{tpu_custom_call.1} parent=11 // pred_fallthru
          _
        // Predicated region
        $region17: #{tpu_custom_call.1} parent=11 // pred_check
          %p159 = pneg %p89
        $region18: #{tpu_custom_call.1} parent=11 // pred_check_branch
          %161 = sbr.rel (%p159) target = $region20
        $region19: #{tpu_custom_call.1} parent=11 // pred_region
          %s163 = ssub.s32 288, 288
          %164 = vsyncadd [#allocation7], %s163
          %s165 = sshll.u32 [#allocation6], 4
          %s166 = int_to_ptr.vmem [resolvable:$true] %s165
          %171 = dma.hbm_to_vmem [thread:$0]  %s2, 288, %s166, [#allocation7], 32, 32, 2
        $region20: #{tpu_custom_call.1} parent=11 // pred_fallthru
          _
      $region12: #{tpu_custom_call.1} parent=5 // pred_fallthru
        _
      %p172 = scmp.lt.s32.totalorder %s21, 2
      // Predicated region
      $region21: #{tpu_custom_call.1} parent=5 // pred_check
        %p173 = pneg %p172
      $region22: #{tpu_custom_call.1} parent=5 // pred_check_branch
        %175 = sbr.rel (%p173) target = $region24
      $region23: #{tpu_custom_call.1} parent=5 // pred_region
        // Predicated region
        $region25: #{tpu_custom_call.1} parent=23 // pred_check
          %p176 = pneg %p41
        $region26: #{tpu_custom_call.1} parent=23 // pred_check_branch
          %178 = sbr.rel (%p176) target = $region28
        $region27: #{tpu_custom_call.1} parent=23 // pred_region
          %s179 = sand.u32 %s31, 1
          %s180 = scalar_lea.sflag [#allocation4], %s179
          %s181 = sand.u32 %s31, 1
          %s182 = smul.addr %s181, 2048
          %s183 = scalar_lea.vmem [#allocation3], %s182
          %s185 = ssub.s32 32768, 32768
          %186 = vsyncadd %s180, %s185
          %s187 = smul.addr %s21, 256
          %s188 = smul.addr %s187, 128
          %s189 = scalar_lea.hbm %s0, %s188
          %s190 = sshll.u32 %s183, 4
          %s191 = int_to_ptr.vmem [resolvable:$true] %s190
          %196 = dma.hbm_to_vmem [thread:$0]  %s189, 32768, %s191, %s180, 256, 256, 16
        $region28: #{tpu_custom_call.1} parent=23 // pred_fallthru
          _
      $region24: #{tpu_custom_call.1} parent=5 // pred_fallthru
        _
      %p197 = scmp.le.s32.totalorder 1, %s21
      %p198 = scmp.lt.s32.totalorder %s21, 3
      %p199 = pnand %p197, %p198
      %p200 = pneg %p199
      // Predicated region
      $region29: #{tpu_custom_call.1} parent=5 // pred_check
        _
      $region30: #{tpu_custom_call.1} parent=5 // pred_check_branch
        %202 = sbr.rel (%p199) target = $region32
      $region31: #{tpu_custom_call.1} parent=5 // pred_region
        %s203 = ssub.s32 %s21, 1
        %s204 = sand.u32 %s34, 1
        %s205 = scalar_lea.sflag [#allocation4], %s204
        %s206 = sand.u32 %s34, 1
        %s207 = smul.addr %s206, 2048
        %s208 = scalar_lea.vmem [#allocation3], %s207
        // Predicated region
        $region33: #{tpu_custom_call.1} parent=31 // pred_check
          %p209 = pneg %p47
        $region34: #{tpu_custom_call.1} parent=31 // pred_check_branch
          %211 = sbr.rel (%p209) target = $region36
        $region35: #{tpu_custom_call.1} parent=31 // pred_region
          %212 = dma.done %s205, 32768
        $region36: #{tpu_custom_call.1} parent=31 // pred_fallthru
          _
        // Predicated region
        $region37: #{tpu_custom_call.1} parent=31 // pred_check
          %p213 = pneg %p89
        $region38: #{tpu_custom_call.1} parent=31 // pred_check_branch
          %215 = sbr.rel (%p213) target = $region40
        $region39: #{tpu_custom_call.1} parent=31 // pred_region
          %216 = dma.done [#allocation7], 288
        $region40: #{tpu_custom_call.1} parent=31 // pred_fallthru
          _
        %s217 = sand.u32 %s34, 1
        %s218 = scalar_lea.sflag [#allocation4], %s217
        %s219 = sand.u32 %s34, 1
        %s220 = smul.addr %s219, 2048
        %s221 = scalar_lea.vmem [#allocation3], %s220
        %p222 = pneg %p47
        %p223 = pneg %p44
        %p224 = pneg %p68
        %p225 = pneg %p65
        %p226 = pneg %p89
        %p227 = pneg %p86
        %p228 = pneg %p115
        %p229 = pneg %p112
        %s230 = sand.u32 %s102, 1
        %s231 = scalar_lea.sflag [#allocation5], %s230
        %s232 = sand.u32 %s102, 1
        %s233 = smul.addr %s232, 512
        %s234 = scalar_lea.vmem [#allocation8], %s233
        %p235 = pneg %p141
        %p236 = pneg %p138
        %s237 = sand.u32 %s128, 1
        %s238 = scalar_lea.sflag [#allocation10], %s237
        %s239 = sand.u32 %s128, 1
        %s240 = smul.addr %s239, 64
        %s241 = scalar_lea.vmem [#allocation9], %s240
        loop: start=0, step=1, limit=8
        $region41: #{tpu_custom_call.1} parent=31 // loop_pre_header
          _
        $region42: #{tpu_custom_call.1} parent=31 // loop_header
          %s244 = sphi 0, %s248
          %p245 = scmp.ge.s32.totalorder %s244, 8
          %v249 = vphi 0.0, %v1404
          %v250 = vphi 0.0, %v1405
          %v251 = vphi 0.0, %v1406
          %v252 = vphi 0.0, %v1407
          %v253 = vphi 0.0, %v1408
          %v254 = vphi 0.0, %v1409
          %v255 = vphi 0.0, %v1410
          %v256 = vphi 0.0, %v1411
          %v257 = vphi 0.0, %v1388
          %v258 = vphi 0.0, %v1389
          %v259 = vphi 0.0, %v1390
          %v260 = vphi 0.0, %v1391
          %v261 = vphi 0.0, %v1392
          %v262 = vphi 0.0, %v1393
          %v263 = vphi 0.0, %v1394
          %v264 = vphi 0.0, %v1395
        $region43: #{tpu_custom_call.1} parent=31 // loop_header_branch
          %247 = sbr.rel (%p245) target = $region47
        $region44: #{tpu_custom_call.1} parent=31 // loop_body
          %265 = vrot.lane.b32.xlu0 %v249, 17
          %v266 = vpop.permute.xlu0 %265
          %267 = vrot.lane.b32.xlu0 %v251, 17
          %v268 = vpop.permute.xlu0 %267
          %269 = vrot.lane.b32.xlu0 %v253, 17
          %v270 = vpop.permute.xlu0 %269
          %271 = vrot.lane.b32.xlu0 %v255, 17
          %v272 = vpop.permute.xlu0 %271
          %273 = vrot.lane.b32.xlu0 %v250, 17
          %v274 = vpop.permute.xlu0 %273
          %275 = vrot.lane.b32.xlu0 %v252, 17
          %v276 = vpop.permute.xlu0 %275
          %277 = vrot.lane.b32.xlu0 %v254, 17
          %v278 = vpop.permute.xlu0 %277
          %279 = vrot.lane.b32.xlu0 %v256, 17
          %v280 = vpop.permute.xlu0 %279
          %v281 = vlaneseq
          %v282 = vand.u32 %v281, 127
          %vm283 = vcmp.lt.s32.totalorder %v282, 17
          %v284 = vsel %vm283, %v266, %v274
          %v285 = vsel %vm283, %v268, %v276
          %v286 = vsel %vm283, %v270, %v278
          %v287 = vsel %vm283, %v272, %v280
          %v288 = vsel %vm283, %v274, %v266
          %v289 = vsel %vm283, %v276, %v268
          %v290 = vsel %vm283, %v278, %v270
          %v291 = vsel %vm283, %v280, %v272
          %v292 = vld [vmem:[#allocation6] sm:$0x3]
          %v294 = vlaneseq
          %v295 = vshrl.u32 %v294, 7
          %v296 = vsub.s32 0, %v295
          %v297 = vrot.slane %v292, %v296
          %v298 = vlaneseq
          %v299 = vshrl.u32 %v298, 7
          %v300 = vsub.s32 1, %v299
          %v301 = vrot.slane %v292, %v300
          %v304 = vmul.f32 %v288, %v297
          %v305 = vmul.f32 %v284, %v301
          %v306 = vmul.f32 %v289, %v297
          %v307 = vmul.f32 %v285, %v301
          %v308 = vmul.f32 %v290, %v297
          %v309 = vmul.f32 %v286, %v301
          %v310 = vmul.f32 %v291, %v297
          %v311 = vmul.f32 %v287, %v301
          %v312 = vpack.c.bf16 %v306, %v304
          %v313 = vpack.c.bf16 %v307, %v305
          %v314 = vpack.c.bf16 %v310, %v308
          %v315 = vpack.c.bf16 %v311, %v309
          %316 = vst [vmem:[#allocation2] sm:$0xff] %v312
          %317 = vst [vmem:[#allocation2 + $0x8] sm:$0xff] %v313
          %318 = vst [vmem:[#allocation2 + $0x10] sm:$0xff] %v314
          %319 = vst [vmem:[#allocation2 + $0x18] sm:$0xff] %v315
          %320 = vrot.lane.b32.xlu0 %v249, 16
          %v321 = vpop.permute.xlu0 %320
          %322 = vrot.lane.b32.xlu0 %v251, 16
          %v323 = vpop.permute.xlu0 %322
          %324 = vrot.lane.b32.xlu0 %v253, 16
          %v325 = vpop.permute.xlu0 %324
          %326 = vrot.lane.b32.xlu0 %v255, 16
          %v327 = vpop.permute.xlu0 %326
          %328 = vrot.lane.b32.xlu0 %v250, 16
          %v329 = vpop.permute.xlu0 %328
          %330 = vrot.lane.b32.xlu0 %v252, 16
          %v331 = vpop.permute.xlu0 %330
          %332 = vrot.lane.b32.xlu0 %v254, 16
          %v333 = vpop.permute.xlu0 %332
          %334 = vrot.lane.b32.xlu0 %v256, 16
          %v335 = vpop.permute.xlu0 %334
          %vm336 = vcmp.lt.s32.totalorder %v282, 16
          %v337 = vsel %vm336, %v321, %v329
          %v338 = vsel %vm336, %v323, %v331
          %v339 = vsel %vm336, %v325, %v333
          %v340 = vsel %vm336, %v327, %v335
          %v341 = vsel %vm336, %v329, %v321
          %v342 = vsel %vm336, %v331, %v323
          %v343 = vsel %vm336, %v333, %v325
          %v344 = vsel %vm336, %v335, %v327
          %s345 = scalar_lea.vmem [#allocation6], 2
          %v346 = vld [vmem:[%s345] sm:$0x3]
          %v348 = vlaneseq
          %v349 = vshrl.u32 %v348, 7
          %v350 = vsub.s32 0, %v349
          %v351 = vrot.slane %v346, %v350
          %v352 = vlaneseq
          %v353 = vshrl.u32 %v352, 7
          %v354 = vsub.s32 1, %v353
          %v355 = vrot.slane %v346, %v354
          %v358 = vmul.f32 %v341, %v351
          %v359 = vmul.f32 %v337, %v355
          %v360 = vmul.f32 %v342, %v351
          %v361 = vmul.f32 %v338, %v355
          %v362 = vmul.f32 %v343, %v351
          %v363 = vmul.f32 %v339, %v355
          %v364 = vmul.f32 %v344, %v351
          %v365 = vmul.f32 %v340, %v355
          %v366 = vpack.c.bf16 %v360, %v358
          %v367 = vpack.c.bf16 %v361, %v359
          %v368 = vpack.c.bf16 %v364, %v362
          %v369 = vpack.c.bf16 %v365, %v363
          %370 = vst [vmem:[#allocation2 + $0x20] sm:$0xff] %v366
          %371 = vst [vmem:[#allocation2 + $0x28] sm:$0xff] %v367
          %372 = vst [vmem:[#allocation2 + $0x30] sm:$0xff] %v368
          %373 = vst [vmem:[#allocation2 + $0x38] sm:$0xff] %v369
          %374 = vrot.lane.b32.xlu0 %v249, 15
          %v375 = vpop.permute.xlu0 %374
          %376 = vrot.lane.b32.xlu0 %v251, 15
          %v377 = vpop.permute.xlu0 %376
          %378 = vrot.lane.b32.xlu0 %v253, 15
          %v379 = vpop.permute.xlu0 %378
          %380 = vrot.lane.b32.xlu0 %v255, 15
          %v381 = vpop.permute.xlu0 %380
          %382 = vrot.lane.b32.xlu0 %v250, 15
          %v383 = vpop.permute.xlu0 %382
          %384 = vrot.lane.b32.xlu0 %v252, 15
          %v385 = vpop.permute.xlu0 %384
          %386 = vrot.lane.b32.xlu0 %v254, 15
          %v387 = vpop.permute.xlu0 %386
          %388 = vrot.lane.b32.xlu0 %v256, 15
          %v389 = vpop.permute.xlu0 %388
          %vm390 = vcmp.lt.s32.totalorder %v282, 15
          %v391 = vsel %vm390, %v375, %v383
          %v392 = vsel %vm390, %v377, %v385
          %v393 = vsel %vm390, %v379, %v387
          %v394 = vsel %vm390, %v381, %v389
          %v395 = vsel %vm390, %v383, %v375
          %v396 = vsel %vm390, %v385, %v377
          %v397 = vsel %vm390, %v387, %v379
          %v398 = vsel %vm390, %v389, %v381
          %s399 = scalar_lea.vmem [#allocation6], 4
          %v400 = vld [vmem:[%s399] sm:$0x3]
          %v402 = vlaneseq
          %v403 = vshrl.u32 %v402, 7
          %v404 = vsub.s32 0, %v403
          %v405 = vrot.slane %v400, %v404
          %v406 = vlaneseq
          %v407 = vshrl.u32 %v406, 7
          %v408 = vsub.s32 1, %v407
          %v409 = vrot.slane %v400, %v408
          %v412 = vmul.f32 %v395, %v405
          %v413 = vmul.f32 %v391, %v409
          %v414 = vmul.f32 %v396, %v405
          %v415 = vmul.f32 %v392, %v409
          %v416 = vmul.f32 %v397, %v405
          %v417 = vmul.f32 %v393, %v409
          %v418 = vmul.f32 %v398, %v405
          %v419 = vmul.f32 %v394, %v409
          %v420 = vpack.c.bf16 %v414, %v412
          %v421 = vpack.c.bf16 %v415, %v413
          %v422 = vpack.c.bf16 %v418, %v416
          %v423 = vpack.c.bf16 %v419, %v417
          %424 = vst [vmem:[#allocation2 + $0x40] sm:$0xff] %v420
          %425 = vst [vmem:[#allocation2 + $0x48] sm:$0xff] %v421
          %426 = vst [vmem:[#allocation2 + $0x50] sm:$0xff] %v422
          %427 = vst [vmem:[#allocation2 + $0x58] sm:$0xff] %v423
          %428 = vrot.lane.b32.xlu0 %v249, 1
          %v429 = vpop.permute.xlu0 %428
          %430 = vrot.lane.b32.xlu0 %v251, 1
          %v431 = vpop.permute.xlu0 %430
          %432 = vrot.lane.b32.xlu0 %v253, 1
          %v433 = vpop.permute.xlu0 %432
          %434 = vrot.lane.b32.xlu0 %v255, 1
          %v435 = vpop.permute.xlu0 %434
          %436 = vrot.lane.b32.xlu0 %v250, 1
          %v437 = vpop.permute.xlu0 %436
          %438 = vrot.lane.b32.xlu0 %v252, 1
          %v439 = vpop.permute.xlu0 %438
          %440 = vrot.lane.b32.xlu0 %v254, 1
          %v441 = vpop.permute.xlu0 %440
          %442 = vrot.lane.b32.xlu0 %v256, 1
          %v443 = vpop.permute.xlu0 %442
          %vm444 = vcmp.lt.s32.totalorder %v282, 1
          %v445 = vsel %vm444, %v429, %v437
          %v446 = vsel %vm444, %v431, %v439
          %v447 = vsel %vm444, %v433, %v441
          %v448 = vsel %vm444, %v435, %v443
          %v449 = vsel %vm444, %v437, %v429
          %v450 = vsel %vm444, %v439, %v431
          %v451 = vsel %vm444, %v441, %v433
          %v452 = vsel %vm444, %v443, %v435
          %s453 = scalar_lea.vmem [#allocation6], 6
          %v454 = vld [vmem:[%s453] sm:$0x3]
          %v456 = vlaneseq
          %v457 = vshrl.u32 %v456, 7
          %v458 = vsub.s32 0, %v457
          %v459 = vrot.slane %v454, %v458
          %v460 = vlaneseq
          %v461 = vshrl.u32 %v460, 7
          %v462 = vsub.s32 1, %v461
          %v463 = vrot.slane %v454, %v462
          %v466 = vmul.f32 %v449, %v459
          %v467 = vmul.f32 %v445, %v463
          %v468 = vmul.f32 %v450, %v459
          %v469 = vmul.f32 %v446, %v463
          %v470 = vmul.f32 %v451, %v459
          %v471 = vmul.f32 %v447, %v463
          %v472 = vmul.f32 %v452, %v459
          %v473 = vmul.f32 %v448, %v463
          %v474 = vpack.c.bf16 %v468, %v466
          %v475 = vpack.c.bf16 %v469, %v467
          %v476 = vpack.c.bf16 %v472, %v470
          %v477 = vpack.c.bf16 %v473, %v471
          %478 = vst [vmem:[#allocation2 + $0x60] sm:$0xff] %v474
          %479 = vst [vmem:[#allocation2 + $0x68] sm:$0xff] %v475
          %480 = vst [vmem:[#allocation2 + $0x70] sm:$0xff] %v476
          %481 = vst [vmem:[#allocation2 + $0x78] sm:$0xff] %v477
          %v482 = vpack.c.bf16 %v251, %v249
          %v483 = vpack.c.bf16 %v252, %v250
          %v484 = vpack.c.bf16 %v255, %v253
          %v485 = vpack.c.bf16 %v256, %v254
          %486 = vst [vmem:[#allocation2 + $0x80] sm:$0xff] %v482
          %487 = vst [vmem:[#allocation2 + $0x88] sm:$0xff] %v483
          %488 = vst [vmem:[#allocation2 + $0x90] sm:$0xff] %v484
          %489 = vst [vmem:[#allocation2 + $0x98] sm:$0xff] %v485
          %490 = vrot.lane.b32.xlu0 %v249, 127
          %v491 = vpop.permute.xlu0 %490
          %492 = vrot.lane.b32.xlu0 %v251, 127
          %v493 = vpop.permute.xlu0 %492
          %494 = vrot.lane.b32.xlu0 %v253, 127
          %v495 = vpop.permute.xlu0 %494
          %496 = vrot.lane.b32.xlu0 %v255, 127
          %v497 = vpop.permute.xlu0 %496
          %498 = vrot.lane.b32.xlu0 %v250, 127
          %v499 = vpop.permute.xlu0 %498
          %500 = vrot.lane.b32.xlu0 %v252, 127
          %v501 = vpop.permute.xlu0 %500
          %502 = vrot.lane.b32.xlu0 %v254, 127
          %v503 = vpop.permute.xlu0 %502
          %504 = vrot.lane.b32.xlu0 %v256, 127
          %v505 = vpop.permute.xlu0 %504
          %vm506 = vcmp.lt.s32.totalorder %v282, 127
          %v507 = vsel %vm506, %v491, %v499
          %v508 = vsel %vm506, %v493, %v501
          %v509 = vsel %vm506, %v495, %v503
          %v510 = vsel %vm506, %v497, %v505
          %v511 = vsel %vm506, %v499, %v491
          %v512 = vsel %vm506, %v501, %v493
          %v513 = vsel %vm506, %v503, %v495
          %v514 = vsel %vm506, %v505, %v497
          %s515 = scalar_lea.vmem [#allocation6], 10
          %v516 = vld [vmem:[%s515] sm:$0x3]
          %v518 = vlaneseq
          %v519 = vshrl.u32 %v518, 7
          %v520 = vsub.s32 0, %v519
          %v521 = vrot.slane %v516, %v520
          %v522 = vlaneseq
          %v523 = vshrl.u32 %v522, 7
          %v524 = vsub.s32 1, %v523
          %v525 = vrot.slane %v516, %v524
          %v528 = vmul.f32 %v507, %v521
          %v529 = vmul.f32 %v511, %v525
          %v530 = vmul.f32 %v508, %v521
          %v531 = vmul.f32 %v512, %v525
          %v532 = vmul.f32 %v509, %v521
          %v533 = vmul.f32 %v513, %v525
          %v534 = vmul.f32 %v510, %v521
          %v535 = vmul.f32 %v514, %v525
          %v536 = vpack.c.bf16 %v530, %v528
          %v537 = vpack.c.bf16 %v531, %v529
          %v538 = vpack.c.bf16 %v534, %v532
          %v539 = vpack.c.bf16 %v535, %v533
          %540 = vst [vmem:[#allocation2 + $0xa0] sm:$0xff] %v536
          %541 = vst [vmem:[#allocation2 + $0xa8] sm:$0xff] %v537
          %542 = vst [vmem:[#allocation2 + $0xb0] sm:$0xff] %v538
          %543 = vst [vmem:[#allocation2 + $0xb8] sm:$0xff] %v539
          %544 = vrot.lane.b32.xlu0 %v249, 113
          %v545 = vpop.permute.xlu0 %544
          %546 = vrot.lane.b32.xlu0 %v251, 113
          %v547 = vpop.permute.xlu0 %546
          %548 = vrot.lane.b32.xlu0 %v253, 113
          %v549 = vpop.permute.xlu0 %548
          %550 = vrot.lane.b32.xlu0 %v255, 113
          %v551 = vpop.permute.xlu0 %550
          %552 = vrot.lane.b32.xlu0 %v250, 113
          %v553 = vpop.permute.xlu0 %552
          %554 = vrot.lane.b32.xlu0 %v252, 113
          %v555 = vpop.permute.xlu0 %554
          %556 = vrot.lane.b32.xlu0 %v254, 113
          %v557 = vpop.permute.xlu0 %556
          %558 = vrot.lane.b32.xlu0 %v256, 113
          %v559 = vpop.permute.xlu0 %558
          %vm560 = vcmp.lt.s32.totalorder %v282, 113
          %v561 = vsel %vm560, %v545, %v553
          %v562 = vsel %vm560, %v547, %v555
          %v563 = vsel %vm560, %v549, %v557
          %v564 = vsel %vm560, %v551, %v559
          %v565 = vsel %vm560, %v553, %v545
          %v566 = vsel %vm560, %v555, %v547
          %v567 = vsel %vm560, %v557, %v549
          %v568 = vsel %vm560, %v559, %v551
          %s569 = scalar_lea.vmem [#allocation6], 12
          %v570 = vld [vmem:[%s569] sm:$0x3]
          %v572 = vlaneseq
          %v573 = vshrl.u32 %v572, 7
          %v574 = vsub.s32 0, %v573
          %v575 = vrot.slane %v570, %v574
          %v576 = vlaneseq
          %v577 = vshrl.u32 %v576, 7
          %v578 = vsub.s32 1, %v577
          %v579 = vrot.slane %v570, %v578
          %v582 = vmul.f32 %v561, %v575
          %v583 = vmul.f32 %v565, %v579
          %v584 = vmul.f32 %v562, %v575
          %v585 = vmul.f32 %v566, %v579
          %v586 = vmul.f32 %v563, %v575
          %v587 = vmul.f32 %v567, %v579
          %v588 = vmul.f32 %v564, %v575
          %v589 = vmul.f32 %v568, %v579
          %v590 = vpack.c.bf16 %v584, %v582
          %v591 = vpack.c.bf16 %v585, %v583
          %v592 = vpack.c.bf16 %v588, %v586
          %v593 = vpack.c.bf16 %v589, %v587
          %594 = vst [vmem:[#allocation2 + $0xc0] sm:$0xff] %v590
          %595 = vst [vmem:[#allocation2 + $0xc8] sm:$0xff] %v591
          %596 = vst [vmem:[#allocation2 + $0xd0] sm:$0xff] %v592
          %597 = vst [vmem:[#allocation2 + $0xd8] sm:$0xff] %v593
          %598 = vrot.lane.b32.xlu0 %v249, 112
          %v599 = vpop.permute.xlu0 %598
          %600 = vrot.lane.b32.xlu0 %v251, 112
          %v601 = vpop.permute.xlu0 %600
          %602 = vrot.lane.b32.xlu0 %v253, 112
          %v603 = vpop.permute.xlu0 %602
          %604 = vrot.lane.b32.xlu0 %v255, 112
          %v605 = vpop.permute.xlu0 %604
          %606 = vrot.lane.b32.xlu0 %v250, 112
          %v607 = vpop.permute.xlu0 %606
          %608 = vrot.lane.b32.xlu0 %v252, 112
          %v609 = vpop.permute.xlu0 %608
          %610 = vrot.lane.b32.xlu0 %v254, 112
          %v611 = vpop.permute.xlu0 %610
          %612 = vrot.lane.b32.xlu0 %v256, 112
          %v613 = vpop.permute.xlu0 %612
          %vm614 = vcmp.lt.s32.totalorder %v282, 112
          %v615 = vsel %vm614, %v599, %v607
          %v616 = vsel %vm614, %v601, %v609
          %v617 = vsel %vm614, %v603, %v611
          %v618 = vsel %vm614, %v605, %v613
          %v619 = vsel %vm614, %v607, %v599
          %v620 = vsel %vm614, %v609, %v601
          %v621 = vsel %vm614, %v611, %v603
          %v622 = vsel %vm614, %v613, %v605
          %s623 = scalar_lea.vmem [#allocation6], 14
          %v624 = vld [vmem:[%s623] sm:$0x3]
          %v626 = vlaneseq
          %v627 = vshrl.u32 %v626, 7
          %v628 = vsub.s32 0, %v627
          %v629 = vrot.slane %v624, %v628
          %v630 = vlaneseq
          %v631 = vshrl.u32 %v630, 7
          %v632 = vsub.s32 1, %v631
          %v633 = vrot.slane %v624, %v632
          %v636 = vmul.f32 %v615, %v629
          %v637 = vmul.f32 %v619, %v633
          %v638 = vmul.f32 %v616, %v629
          %v639 = vmul.f32 %v620, %v633
          %v640 = vmul.f32 %v617, %v629
          %v641 = vmul.f32 %v621, %v633
          %v642 = vmul.f32 %v618, %v629
          %v643 = vmul.f32 %v622, %v633
          %v644 = vpack.c.bf16 %v638, %v636
          %v645 = vpack.c.bf16 %v639, %v637
          %v646 = vpack.c.bf16 %v642, %v640
          %v647 = vpack.c.bf16 %v643, %v641
          %648 = vst [vmem:[#allocation2 + $0xe0] sm:$0xff] %v644
          %649 = vst [vmem:[#allocation2 + $0xe8] sm:$0xff] %v645
          %650 = vst [vmem:[#allocation2 + $0xf0] sm:$0xff] %v646
          %651 = vst [vmem:[#allocation2 + $0xf8] sm:$0xff] %v647
          %652 = vrot.lane.b32.xlu0 %v249, 111
          %v653 = vpop.permute.xlu0 %652
          %654 = vrot.lane.b32.xlu0 %v251, 111
          %v655 = vpop.permute.xlu0 %654
          %656 = vrot.lane.b32.xlu0 %v253, 111
          %v657 = vpop.permute.xlu0 %656
          %658 = vrot.lane.b32.xlu0 %v255, 111
          %v659 = vpop.permute.xlu0 %658
          %660 = vrot.lane.b32.xlu0 %v250, 111
          %v661 = vpop.permute.xlu0 %660
          %662 = vrot.lane.b32.xlu0 %v252, 111
          %v663 = vpop.permute.xlu0 %662
          %664 = vrot.lane.b32.xlu0 %v254, 111
          %v665 = vpop.permute.xlu0 %664
          %666 = vrot.lane.b32.xlu0 %v256, 111
          %v667 = vpop.permute.xlu0 %666
          %vm668 = vcmp.lt.s32.totalorder %v282, 111
          %v669 = vsel %vm668, %v653, %v661
          %v670 = vsel %vm668, %v655, %v663
          %v671 = vsel %vm668, %v657, %v665
          %v672 = vsel %vm668, %v659, %v667
          %v673 = vsel %vm668, %v661, %v653
          %v674 = vsel %vm668, %v663, %v655
          %v675 = vsel %vm668, %v665, %v657
          %v676 = vsel %vm668, %v667, %v659
          %s677 = scalar_lea.vmem [#allocation6], 16
          %v678 = vld [vmem:[%s677] sm:$0x3]
          %v680 = vlaneseq
          %v681 = vshrl.u32 %v680, 7
          %v682 = vsub.s32 0, %v681
          %v683 = vrot.slane %v678, %v682
          %v684 = vlaneseq
          %v685 = vshrl.u32 %v684, 7
          %v686 = vsub.s32 1, %v685
          %v687 = vrot.slane %v678, %v686
          %v690 = vmul.f32 %v669, %v683
          %v691 = vmul.f32 %v673, %v687
          %v692 = vmul.f32 %v670, %v683
          %v693 = vmul.f32 %v674, %v687
          %v694 = vmul.f32 %v671, %v683
          %v695 = vmul.f32 %v675, %v687
          %v696 = vmul.f32 %v672, %v683
          %v697 = vmul.f32 %v676, %v687
          %v698 = vpack.c.bf16 %v692, %v690
          %v699 = vpack.c.bf16 %v693, %v691
          %v700 = vpack.c.bf16 %v696, %v694
          %v701 = vpack.c.bf16 %v697, %v695
          %702 = vst [vmem:[#allocation2 + $0x100] sm:$0xff] %v698
          %703 = vst [vmem:[#allocation2 + $0x108] sm:$0xff] %v699
          %704 = vst [vmem:[#allocation2 + $0x110] sm:$0xff] %v700
          %705 = vst [vmem:[#allocation2 + $0x118] sm:$0xff] %v701
          %v706 = vld [vmem:[%s1] sm:$0xff]
          %v707 = vld [vmem:[%s1 + $0x8] sm:$0xf]
          %v708 = vld [vmem:[%s1 + $0xc] sm:$0xff]
          %v709 = vld [vmem:[%s1 + $0x14] sm:$0xf]
          %v710 = vld [vmem:[%s1 + $0x18] sm:$0xff]
          %v711 = vld [vmem:[%s1 + $0x20] sm:$0xf]
          %v712 = vld [vmem:[%s1 + $0x24] sm:$0xff]
          %v713 = vld [vmem:[%s1 + $0x2c] sm:$0xf]
          %v714 = vld [vmem:[%s1 + $0x30] sm:$0xff]
          %v715 = vld [vmem:[%s1 + $0x38] sm:$0xf]
          %v716 = vld [vmem:[%s1 + $0x3c] sm:$0xff]
          %v717 = vld [vmem:[%s1 + $0x44] sm:$0xf]
          %v718 = vld [vmem:[%s1 + $0x48] sm:$0xff]
          %v719 = vld [vmem:[%s1 + $0x50] sm:$0xf]
          %v720 = vld [vmem:[%s1 + $0x54] sm:$0xff]
          %v721 = vld [vmem:[%s1 + $0x5c] sm:$0xf]
          %v722 = vld [vmem:[%s1 + $0x60] sm:$0xff]
          %v723 = vld [vmem:[%s1 + $0x68] sm:$0xf]
          %v724 = vld [vmem:[%s1 + $0x6c] sm:$0xff]
          %v725 = vld [vmem:[%s1 + $0x74] sm:$0xf]
          %v726 = vld [vmem:[%s1 + $0x78] sm:$0xff]
          %v727 = vld [vmem:[%s1 + $0x80] sm:$0xf]
          %v728 = vld [vmem:[%s1 + $0x84] sm:$0xff]
          %v729 = vld [vmem:[%s1 + $0x8c] sm:$0xf]
          %v730 = vld [vmem:[%s1 + $0x90] sm:$0xff]
          %v731 = vld [vmem:[%s1 + $0x98] sm:$0xf]
          %v732 = vld [vmem:[%s1 + $0x9c] sm:$0xff]
          %v733 = vld [vmem:[%s1 + $0xa4] sm:$0xf]
          %v734 = vld [vmem:[%s1 + $0xa8] sm:$0xff]
          %v735 = vld [vmem:[%s1 + $0xb0] sm:$0xf]
          %v736 = vld [vmem:[%s1 + $0xb4] sm:$0xff]
          %v737 = vld [vmem:[%s1 + $0xbc] sm:$0xf]
          %v738 = vld [vmem:[#allocation2] sm:$0xff]
          %v739 = vld [vmem:[#allocation2 + $0x8] sm:$0xff]
          %v740 = vld [vmem:[#allocation2 + $0x10] sm:$0xff]
          %v741 = vld [vmem:[#allocation2 + $0x18] sm:$0xff]
          %v742 = vld [vmem:[#allocation2 + $0x20] sm:$0xff]
          %v743 = vld [vmem:[#allocation2 + $0x28] sm:$0xff]
          %v744 = vld [vmem:[#allocation2 + $0x30] sm:$0xff]
          %v745 = vld [vmem:[#allocation2 + $0x38] sm:$0xff]
          %v746 = vld [vmem:[#allocation2 + $0x40] sm:$0xff]
          %v747 = vld [vmem:[#allocation2 + $0x48] sm:$0xff]
          %v748 = vld [vmem:[#allocation2 + $0x50] sm:$0xff]
          %v749 = vld [vmem:[#allocation2 + $0x58] sm:$0xff]
          %v750 = vld [vmem:[#allocation2 + $0x60] sm:$0xff]
          %v751 = vld [vmem:[#allocation2 + $0x68] sm:$0xff]
          %v752 = vld [vmem:[#allocation2 + $0x70] sm:$0xff]
          %v753 = vld [vmem:[#allocation2 + $0x78] sm:$0xff]
          %v754 = vld [vmem:[#allocation2 + $0x80] sm:$0xff]
          %v755 = vld [vmem:[#allocation2 + $0x88] sm:$0xff]
          %v756 = vld [vmem:[#allocation2 + $0x90] sm:$0xff]
          %v757 = vld [vmem:[#allocation2 + $0x98] sm:$0xff]
          %v758 = vld [vmem:[#allocation2 + $0xa0] sm:$0xff]
          %v759 = vld [vmem:[#allocation2 + $0xa8] sm:$0xff]
          %v760 = vld [vmem:[#allocation2 + $0xb0] sm:$0xff]
          %v761 = vld [vmem:[#allocation2 + $0xb8] sm:$0xff]
          %v762 = vld [vmem:[#allocation2 + $0xc0] sm:$0xff]
          %v763 = vld [vmem:[#allocation2 + $0xc8] sm:$0xff]
          %v764 = vld [vmem:[#allocation2 + $0xd0] sm:$0xff]
          %v765 = vld [vmem:[#allocation2 + $0xd8] sm:$0xff]
          %v766 = vld [vmem:[#allocation2 + $0xe0] sm:$0xff]
          %v767 = vld [vmem:[#allocation2 + $0xe8] sm:$0xff]
          %v768 = vld [vmem:[#allocation2 + $0xf0] sm:$0xff]
          %v769 = vld [vmem:[#allocation2 + $0xf8] sm:$0xff]
          %v770 = vld [vmem:[#allocation2 + $0x100] sm:$0xff]
          %v771 = vld [vmem:[#allocation2 + $0x108] sm:$0xff]
          %v772 = vld [vmem:[#allocation2 + $0x110] sm:$0xff]
          %v773 = vld [vmem:[#allocation2 + $0x118] sm:$0xff]
          %s774 = smul.u32 %s244, 32
          %s775 = smul.addr %s774, 8
          %s776 = scalar_lea.vmem %s208, %s775 [#allocation3]
          %v777 = vld [vmem:[%s776] sm:$0xff]
          %v778 = vld [vmem:[%s776 + $0x8] sm:$0xff]
          %v779 = vld [vmem:[%s776 + $0x10] sm:$0xff]
          %v780 = vld [vmem:[%s776 + $0x18] sm:$0xff]
          %v781 = vld [vmem:[%s776 + $0x20] sm:$0xff]
          %v782 = vld [vmem:[%s776 + $0x28] sm:$0xff]
          %v783 = vld [vmem:[%s776 + $0x30] sm:$0xff]
          %v784 = vld [vmem:[%s776 + $0x38] sm:$0xff]
          %v785 = vld [vmem:[%s776 + $0x40] sm:$0xff]
          %v786 = vld [vmem:[%s776 + $0x48] sm:$0xff]
          %v787 = vld [vmem:[%s776 + $0x50] sm:$0xff]
          %v788 = vld [vmem:[%s776 + $0x58] sm:$0xff]
          %v789 = vld [vmem:[%s776 + $0x60] sm:$0xff]
          %v790 = vld [vmem:[%s776 + $0x68] sm:$0xff]
          %v791 = vld [vmem:[%s776 + $0x70] sm:$0xff]
          %v792 = vld [vmem:[%s776 + $0x78] sm:$0xff]
          %v793 = vld [vmem:[%s776 + $0x80] sm:$0xff]
          %v794 = vld [vmem:[%s776 + $0x88] sm:$0xff]
          %v795 = vld [vmem:[%s776 + $0x90] sm:$0xff]
          %v796 = vld [vmem:[%s776 + $0x98] sm:$0xff]
          %v797 = vld [vmem:[%s776 + $0xa0] sm:$0xff]
          %v798 = vld [vmem:[%s776 + $0xa8] sm:$0xff]
          %v799 = vld [vmem:[%s776 + $0xb0] sm:$0xff]
          %v800 = vld [vmem:[%s776 + $0xb8] sm:$0xff]
          %v801 = vld [vmem:[%s776 + $0xc0] sm:$0xff]
          %v802 = vld [vmem:[%s776 + $0xc8] sm:$0xff]
          %v803 = vld [vmem:[%s776 + $0xd0] sm:$0xff]
          %v804 = vld [vmem:[%s776 + $0xd8] sm:$0xff]
          %v805 = vld [vmem:[%s776 + $0xe0] sm:$0xff]
          %v806 = vld [vmem:[%s776 + $0xe8] sm:$0xff]
          %v807 = vld [vmem:[%s776 + $0xf0] sm:$0xff]
          %v808 = vld [vmem:[%s776 + $0xf8] sm:$0xff]
          %v841 = vunpack.c.l.b16 %v706
          %v842 = vunpack.c.h.b16 %v706
          %v843 = vunpack.c.l.b16 %v707
          %v844 = vunpack.c.l.b16 %v708
          %v845 = vunpack.c.h.b16 %v708
          %v846 = vunpack.c.l.b16 %v709
          %v847 = vunpack.c.l.b16 %v710
          %v848 = vunpack.c.h.b16 %v710
          %v849 = vunpack.c.l.b16 %v711
          %v850 = vunpack.c.l.b16 %v712
          %v851 = vunpack.c.h.b16 %v712
          %v852 = vunpack.c.l.b16 %v713
          %v853 = vunpack.c.l.b16 %v714
          %v854 = vunpack.c.h.b16 %v714
          %v855 = vunpack.c.l.b16 %v715
          %v856 = vunpack.c.l.b16 %v716
          %v857 = vunpack.c.h.b16 %v716
          %v858 = vunpack.c.l.b16 %v717
          %v859 = vunpack.c.l.b16 %v718
          %v860 = vunpack.c.h.b16 %v718
          %v861 = vunpack.c.l.b16 %v719
          %v862 = vunpack.c.l.b16 %v720
          %v863 = vunpack.c.h.b16 %v720
          %v864 = vunpack.c.l.b16 %v721
          %v865 = vunpack.c.l.b16 %v722
          %v866 = vunpack.c.h.b16 %v722
          %v867 = vunpack.c.l.b16 %v723
          %v868 = vunpack.c.l.b16 %v724
          %v869 = vunpack.c.h.b16 %v724
          %v870 = vunpack.c.l.b16 %v725
          %v871 = vunpack.c.l.b16 %v726
          %v872 = vunpack.c.h.b16 %v726
          %v873 = vunpack.c.l.b16 %v727
          %v874 = vunpack.c.l.b16 %v728
          %v875 = vunpack.c.h.b16 %v728
          %v876 = vunpack.c.l.b16 %v729
          %v877 = vunpack.c.l.b16 %v730
          %v878 = vunpack.c.h.b16 %v730
          %v879 = vunpack.c.l.b16 %v731
          %v880 = vunpack.c.l.b16 %v732
          %v881 = vunpack.c.h.b16 %v732
          %v882 = vunpack.c.l.b16 %v733
          %v883 = vunpack.c.l.b16 %v734
          %v884 = vunpack.c.h.b16 %v734
          %v885 = vunpack.c.l.b16 %v735
          %v886 = vunpack.c.l.b16 %v736
          %v887 = vunpack.c.h.b16 %v736
          %v888 = vunpack.c.l.b16 %v737
          %v889 = vpack.c.b16 %v844, %v841
          %v890 = vpack.c.b16 %v845, %v842
          %v891 = vpack.c.b16 %v846, %v843
          %v892 = vpack.c.b16 %v850, %v847
          %v893 = vpack.c.b16 %v851, %v848
          %v894 = vpack.c.b16 %v852, %v849
          %v895 = vpack.c.b16 %v856, %v853
          %v896 = vpack.c.b16 %v857, %v854
          %v897 = vpack.c.b16 %v858, %v855
          %v898 = vpack.c.b16 %v862, %v859
          %v899 = vpack.c.b16 %v863, %v860
          %v900 = vpack.c.b16 %v864, %v861
          %v901 = vpack.c.b16 %v868, %v865
          %v902 = vpack.c.b16 %v869, %v866
          %v903 = vpack.c.b16 %v870, %v867
          %v904 = vpack.c.b16 %v874, %v871
          %v905 = vpack.c.b16 %v875, %v872
          %v906 = vpack.c.b16 %v876, %v873
          %v907 = vpack.c.b16 %v880, %v877
          %v908 = vpack.c.b16 %v881, %v878
          %v909 = vpack.c.b16 %v882, %v879
          %v910 = vpack.c.b16 %v886, %v883
          %v911 = vpack.c.b16 %v887, %v884
          %v912 = vpack.c.b16 %v888, %v885
          %vm929 = vcmask 261120
          %v931 = vsel %vm929, %v891, 0
          %v934 = vsel %vm929, %v894, 0
          %v937 = vsel %vm929, %v897, 0
          %v940 = vsel %vm929, %v900, 0
          %v943 = vsel %vm929, %v903, 0
          %v946 = vsel %vm929, %v906, 0
          %v949 = vsel %vm929, %v909, 0
          %v952 = vsel %vm929, %v912, 0
          %954 = vmatprep.subr.bf16.mxu0 %v739
          %955 = vmatpush1.bf16.msra.mxu0 %v738
          %956 = vmatprep.subr.bf16.mxu0 %v741
          %957 = vmatpush1.bf16.msra.mxu0 %v740
          %958 = vmatprep.subr.bf16.mxu0 %v743
          %959 = vmatpush1.bf16.msra.mxu0 %v742
          %960 = vmatprep.subr.bf16.mxu0 %v745
          %961 = vmatpush1.bf16.msra.mxu0 %v744
          %962 = vmatprep.subr.bf16.mxu0 %v747
          %963 = vmatpush1.bf16.msra.mxu0 %v746
          %964 = vmatprep.subr.bf16.mxu0 %v749
          %965 = vmatpush1.bf16.msra.mxu0 %v748
          %966 = vmatprep.subr.bf16.mxu0 %v751
          %967 = vmatpush1.bf16.msra.mxu0 %v750
          %968 = vmatprep.subr.bf16.mxu0 %v753
          %969 = vmatpush1.bf16.msra.mxu0 %v752
          %970 = vmatprep.subr.bf16.mxu0 %v755
          %971 = vmatpush1.bf16.msra.mxu0 %v754
          %972 = vmatprep.subr.bf16.mxu0 %v757
          %973 = vmatpush1.bf16.msra.mxu0 %v756
          %974 = vmatprep.subr.bf16.mxu0 %v759
          %975 = vmatpush1.bf16.msra.mxu0 %v758
          %976 = vmatprep.subr.bf16.mxu0 %v761
          %977 = vmatpush1.bf16.msra.mxu0 %v760
          %978 = vmatprep.subr.bf16.mxu0 %v763
          %979 = vmatpush1.bf16.msra.mxu0 %v762
          %980 = vmatprep.subr.bf16.mxu0 %v765
          %981 = vmatpush1.bf16.msra.mxu0 %v764
          %982 = vmatprep.subr.bf16.mxu0 %v767
          %983 = vmatpush1.bf16.msra.mxu0 %v766
          %984 = vmatprep.subr.bf16.mxu0 %v769
          %985 = vmatpush1.bf16.msra.mxu0 %v768
          %986 = vmatprep.mubr.bf16.mxu0 %v890
          %987 = vmatmul.mubr.bf16.gmra.mrb[0].mxu0 %v889
          %v988 = vpop.f32.mrb[0].mxu0
          %v989 = vadd.f32 %v777, %v988
          %v990 = vpop.f32.mrb[0].mxu0
          %v991 = vadd.f32 %v778, %v990
          %v992 = vpop.f32.mrb[0].mxu0
          %v993 = vadd.f32 %v779, %v992
          %v994 = vpop.f32.mrb[0].mxu0
          %v995 = vadd.f32 %v780, %v994
          %996 = vmatprep.mubr.bf16.mxu0 %v893
          %997 = vmatmul.mubr.bf16.gmra.mrb[0].mxu0 %v892
          %v998 = vpop.f32.mrb[0].mxu0
          %v999 = vadd.f32 %v781, %v998
          %v1000 = vpop.f32.mrb[0].mxu0
          %v1001 = vadd.f32 %v782, %v1000
          %v1002 = vpop.f32.mrb[0].mxu0
          %v1003 = vadd.f32 %v783, %v1002
          %v1004 = vpop.f32.mrb[0].mxu0
          %v1005 = vadd.f32 %v784, %v1004
          %1006 = vmatprep.mubr.bf16.mxu0 %v896
          %1007 = vmatmul.mubr.bf16.gmra.mrb[0].mxu0 %v895
          %v1008 = vpop.f32.mrb[0].mxu0
          %v1009 = vadd.f32 %v785, %v1008
          %v1010 = vpop.f32.mrb[0].mxu0
          %v1011 = vadd.f32 %v786, %v1010
          %v1012 = vpop.f32.mrb[0].mxu0
          %v1013 = vadd.f32 %v787, %v1012
          %v1014 = vpop.f32.mrb[0].mxu0
          %v1015 = vadd.f32 %v788, %v1014
          %1016 = vmatprep.mubr.bf16.mxu0 %v899
          %1017 = vmatmul.mubr.bf16.gmra.mrb[0].mxu0 %v898
          %v1018 = vpop.f32.mrb[0].mxu0
          %v1019 = vadd.f32 %v789, %v1018
          %v1020 = vpop.f32.mrb[0].mxu0
          %v1021 = vadd.f32 %v790, %v1020
          %v1022 = vpop.f32.mrb[0].mxu0
          %v1023 = vadd.f32 %v791, %v1022
          %v1024 = vpop.f32.mrb[0].mxu0
          %v1025 = vadd.f32 %v792, %v1024
          %1026 = vmatprep.mubr.bf16.mxu0 %v902
          %1027 = vmatmul.mubr.bf16.gmra.mrb[0].mxu0 %v901
          %v1028 = vpop.f32.mrb[0].mxu0
          %v1029 = vadd.f32 %v793, %v1028
          %v1030 = vpop.f32.mrb[0].mxu0
          %v1031 = vadd.f32 %v794, %v1030
          %v1032 = vpop.f32.mrb[0].mxu0
          %v1033 = vadd.f32 %v795, %v1032
          %v1034 = vpop.f32.mrb[0].mxu0
          %v1035 = vadd.f32 %v796, %v1034
          %1036 = vmatprep.mubr.bf16.mxu0 %v905
          %1037 = vmatmul.mubr.bf16.gmra.mrb[0].mxu0 %v904
          %v1038 = vpop.f32.mrb[0].mxu0
          %v1039 = vadd.f32 %v797, %v1038
          %v1040 = vpop.f32.mrb[0].mxu0
          %v1041 = vadd.f32 %v798, %v1040
          %v1042 = vpop.f32.mrb[0].mxu0
          %v1043 = vadd.f32 %v799, %v1042
          %v1044 = vpop.f32.mrb[0].mxu0
          %v1045 = vadd.f32 %v800, %v1044
          %1046 = vmatprep.mubr.bf16.mxu0 %v908
          %1047 = vmatmul.mubr.bf16.gmra.mrb[0].mxu0 %v907
          %v1048 = vpop.f32.mrb[0].mxu0
          %v1049 = vadd.f32 %v801, %v1048
          %v1050 = vpop.f32.mrb[0].mxu0
          %v1051 = vadd.f32 %v802, %v1050
          %v1052 = vpop.f32.mrb[0].mxu0
          %v1053 = vadd.f32 %v803, %v1052
          %v1054 = vpop.f32.mrb[0].mxu0
          %v1055 = vadd.f32 %v804, %v1054
          %1056 = vmatprep.mubr.bf16.mxu0 %v911
          %1057 = vmatmul.mubr.bf16.gmra.mrb[0].mxu0 %v910
          %v1058 = vpop.f32.mrb[0].mxu0
          %v1059 = vadd.f32 %v805, %v1058
          %v1060 = vpop.f32.mrb[0].mxu0
          %v1061 = vadd.f32 %v806, %v1060
          %v1062 = vpop.f32.mrb[0].mxu0
          %v1063 = vadd.f32 %v807, %v1062
          %v1064 = vpop.f32.mrb[0].mxu0
          %v1065 = vadd.f32 %v808, %v1064
          %1066 = vdwg.mxu0
          %1067 = vmatprep.subr.bf16.mxu0 %v771
          %1068 = vmatpush1.bf16.msra.mxu0 %v770
          %1069 = vmatprep.subr.bf16.mxu0 %v773
          %1070 = vmatpush1.bf16.msra.mxu0 %v772
          %1071 = vmatprep.subr.bf16.mxu0 0
          %1072 = vmatpush1.bf16.msra.mxu0 0
          %1073 = vmatprep.subr.bf16.mxu0 0
          %1074 = vmatpush1.bf16.msra.mxu0 0
          %1075 = vmatprep.subr.bf16.mxu0 0
          %1076 = vmatpush1.bf16.msra.mxu0 0
          %1077 = vmatprep.subr.bf16.mxu0 0
          %1078 = vmatpush1.bf16.msra.mxu0 0
          %1079 = vmatprep.subr.bf16.mxu0 0
          %1080 = vmatpush1.bf16.msra.mxu0 0
          %1081 = vmatprep.subr.bf16.mxu0 0
          %1082 = vmatpush1.bf16.msra.mxu0 0
          %1083 = vmatprep.subr.bf16.mxu0 0
          %1084 = vmatpush1.bf16.msra.mxu0 0
          %1085 = vmatprep.subr.bf16.mxu0 0
          %1086 = vmatpush1.bf16.msra.mxu0 0
          %1087 = vmatprep.subr.bf16.mxu0 0
          %1088 = vmatpush1.bf16.msra.mxu0 0
          %1089 = vmatprep.subr.bf16.mxu0 0
          %1090 = vmatpush1.bf16.msra.mxu0 0
          %1091 = vmatprep.subr.bf16.mxu0 0
          %1092 = vmatpush1.bf16.msra.mxu0 0
          %1093 = vmatprep.subr.bf16.mxu0 0
          %1094 = vmatpush1.bf16.msra.mxu0 0
          %1095 = vmatprep.subr.bf16.mxu0 0
          %1096 = vmatpush1.bf16.msra.mxu0 0
          %1097 = vmatprep.subr.bf16.mxu0 0
          %1098 = vmatpush1.bf16.msra.mxu0 0
          %1099 = vmatprep.mubr.bf16.mxu0 0
          %1100 = vmatmul.mubr.bf16.gmra.mrb[0].mxu0 %v931
          %v1101 = vpop.f32.mrb[0].mxu0
          %v1102 = vadd.f32 %v989, %v1101
          %v1103 = vpop.f32.mrb[0].mxu0
          %v1104 = vadd.f32 %v991, %v1103
          %v1105 = vpop.f32.mrb[0].mxu0
          %v1106 = vadd.f32 %v993, %v1105
          %v1107 = vpop.f32.mrb[0].mxu0
          %v1108 = vadd.f32 %v995, %v1107
          %1109 = vmatprep.mubr.bf16.mxu0 0
          %1110 = vmatmul.mubr.bf16.gmra.mrb[0].mxu0 %v934
          %v1111 = vpop.f32.mrb[0].mxu0
          %v1112 = vadd.f32 %v999, %v1111
          %v1113 = vpop.f32.mrb[0].mxu0
          %v1114 = vadd.f32 %v1001, %v1113
          %v1115 = vpop.f32.mrb[0].mxu0
          %v1116 = vadd.f32 %v1003, %v1115
          %v1117 = vpop.f32.mrb[0].mxu0
          %v1118 = vadd.f32 %v1005, %v1117
          %1119 = vmatprep.mubr.bf16.mxu0 0
          %1120 = vmatmul.mubr.bf16.gmra.mrb[0].mxu0 %v937
          %v1121 = vpop.f32.mrb[0].mxu0
          %v1122 = vadd.f32 %v1009, %v1121
          %v1123 = vpop.f32.mrb[0].mxu0
          %v1124 = vadd.f32 %v1011, %v1123
          %v1125 = vpop.f32.mrb[0].mxu0
          %v1126 = vadd.f32 %v1013, %v1125
          %v1127 = vpop.f32.mrb[0].mxu0
          %v1128 = vadd.f32 %v1015, %v1127
          %1129 = vmatprep.mubr.bf16.mxu0 0
          %1130 = vmatmul.mubr.bf16.gmra.mrb[0].mxu0 %v940
          %v1131 = vpop.f32.mrb[0].mxu0
          %v1132 = vadd.f32 %v1019, %v1131
          %v1133 = vpop.f32.mrb[0].mxu0
          %v1134 = vadd.f32 %v1021, %v1133
          %v1135 = vpop.f32.mrb[0].mxu0
          %v1136 = vadd.f32 %v1023, %v1135
          %v1137 = vpop.f32.mrb[0].mxu0
          %v1138 = vadd.f32 %v1025, %v1137
          %1139 = vmatprep.mubr.bf16.mxu0 0
          %1140 = vmatmul.mubr.bf16.gmra.mrb[0].mxu0 %v943
          %v1141 = vpop.f32.mrb[0].mxu0
          %v1142 = vadd.f32 %v1029, %v1141
          %v1143 = vpop.f32.mrb[0].mxu0
          %v1144 = vadd.f32 %v1031, %v1143
          %v1145 = vpop.f32.mrb[0].mxu0
          %v1146 = vadd.f32 %v1033, %v1145
          %v1147 = vpop.f32.mrb[0].mxu0
          %v1148 = vadd.f32 %v1035, %v1147
          %1149 = vmatprep.mubr.bf16.mxu0 0
          %1150 = vmatmul.mubr.bf16.gmra.mrb[0].mxu0 %v946
          %v1151 = vpop.f32.mrb[0].mxu0
          %v1152 = vadd.f32 %v1039, %v1151
          %v1153 = vpop.f32.mrb[0].mxu0
          %v1154 = vadd.f32 %v1041, %v1153
          %v1155 = vpop.f32.mrb[0].mxu0
          %v1156 = vadd.f32 %v1043, %v1155
          %v1157 = vpop.f32.mrb[0].mxu0
          %v1158 = vadd.f32 %v1045, %v1157
          %1159 = vmatprep.mubr.bf16.mxu0 0
          %1160 = vmatmul.mubr.bf16.gmra.mrb[0].mxu0 %v949
          %v1161 = vpop.f32.mrb[0].mxu0
          %v1162 = vadd.f32 %v1049, %v1161
          %v1163 = vpop.f32.mrb[0].mxu0
          %v1164 = vadd.f32 %v1051, %v1163
          %v1165 = vpop.f32.mrb[0].mxu0
          %v1166 = vadd.f32 %v1053, %v1165
          %v1167 = vpop.f32.mrb[0].mxu0
          %v1168 = vadd.f32 %v1055, %v1167
          %1169 = vmatprep.mubr.bf16.mxu0 0
          %1170 = vmatmul.mubr.bf16.gmra.mrb[0].mxu0 %v952
          %v1171 = vpop.f32.mrb[0].mxu0
          %v1172 = vadd.f32 %v1059, %v1171
          %v1173 = vpop.f32.mrb[0].mxu0
          %v1174 = vadd.f32 %v1061, %v1173
          %v1175 = vpop.f32.mrb[0].mxu0
          %v1176 = vadd.f32 %v1063, %v1175
          %v1177 = vpop.f32.mrb[0].mxu0
          %v1178 = vadd.f32 %v1065, %v1177
          %1179 = vdwg.mxu0
          %v1180 = vxor.u32 %v1102, 2147483648
          %v1181 = vxor.u32 %v1104, 2147483648
          %v1182 = vxor.u32 %v1106, 2147483648
          %v1183 = vxor.u32 %v1108, 2147483648
          %v1184 = vxor.u32 %v1112, 2147483648
          %v1185 = vxor.u32 %v1114, 2147483648
          %v1186 = vxor.u32 %v1116, 2147483648
          %v1187 = vxor.u32 %v1118, 2147483648
          %v1188 = vxor.u32 %v1122, 2147483648
          %v1189 = vxor.u32 %v1124, 2147483648
          %v1190 = vxor.u32 %v1126, 2147483648
          %v1191 = vxor.u32 %v1128, 2147483648
          %v1192 = vxor.u32 %v1132, 2147483648
          %v1193 = vxor.u32 %v1134, 2147483648
          %v1194 = vxor.u32 %v1136, 2147483648
          %v1195 = vxor.u32 %v1138, 2147483648
          %v1196 = vxor.u32 %v1142, 2147483648
          %v1197 = vxor.u32 %v1144, 2147483648
          %v1198 = vxor.u32 %v1146, 2147483648
          %v1199 = vxor.u32 %v1148, 2147483648
          %v1200 = vxor.u32 %v1152, 2147483648
          %v1201 = vxor.u32 %v1154, 2147483648
          %v1202 = vxor.u32 %v1156, 2147483648
          %v1203 = vxor.u32 %v1158, 2147483648
          %v1204 = vxor.u32 %v1162, 2147483648
          %v1205 = vxor.u32 %v1164, 2147483648
          %v1206 = vxor.u32 %v1166, 2147483648
          %v1207 = vxor.u32 %v1168, 2147483648
          %v1208 = vxor.u32 %v1172, 2147483648
          %v1209 = vxor.u32 %v1174, 2147483648
          %v1210 = vxor.u32 %v1176, 2147483648
          %v1211 = vxor.u32 %v1178, 2147483648
          %v1212 = vmul.f32 %v1180, 1.442695
          %v1213 = vpow.pop %v1212
          %v1214 = vmul.f32 %v1181, 1.442695
          %v1215 = vpow.pop %v1214
          %v1216 = vmul.f32 %v1182, 1.442695
          %v1217 = vpow.pop %v1216
          %v1218 = vmul.f32 %v1183, 1.442695
          %v1219 = vpow.pop %v1218
          %v1220 = vmul.f32 %v1184, 1.442695
          %v1221 = vpow.pop %v1220
          %v1222 = vmul.f32 %v1185, 1.442695
          %v1223 = vpow.pop %v1222
          %v1224 = vmul.f32 %v1186, 1.442695
          %v1225 = vpow.pop %v1224
          %v1226 = vmul.f32 %v1187, 1.442695
          %v1227 = vpow.pop %v1226
          %v1228 = vmul.f32 %v1188, 1.442695
          %v1229 = vpow.pop %v1228
          %v1230 = vmul.f32 %v1189, 1.442695
          %v1231 = vpow.pop %v1230
          %v1232 = vmul.f32 %v1190, 1.442695
          %v1233 = vpow.pop %v1232
          %v1234 = vmul.f32 %v1191, 1.442695
          %v1235 = vpow.pop %v1234
          %v1236 = vmul.f32 %v1192, 1.442695
          %v1237 = vpow.pop %v1236
          %v1238 = vmul.f32 %v1193, 1.442695
          %v1239 = vpow.pop %v1238
          %v1240 = vmul.f32 %v1194, 1.442695
          %v1241 = vpow.pop %v1240
          %v1242 = vmul.f32 %v1195, 1.442695
          %v1243 = vpow.pop %v1242
          %v1244 = vmul.f32 %v1196, 1.442695
          %v1245 = vpow.pop %v1244
          %v1246 = vmul.f32 %v1197, 1.442695
          %v1247 = vpow.pop %v1246
          %v1248 = vmul.f32 %v1198, 1.442695
          %v1249 = vpow.pop %v1248
          %v1250 = vmul.f32 %v1199, 1.442695
          %v1251 = vpow.pop %v1250
          %v1252 = vmul.f32 %v1200, 1.442695
          %v1253 = vpow.pop %v1252
          %v1254 = vmul.f32 %v1201, 1.442695
          %v1255 = vpow.pop %v1254
          %v1256 = vmul.f32 %v1202, 1.442695
          %v1257 = vpow.pop %v1256
          %v1258 = vmul.f32 %v1203, 1.442695
          %v1259 = vpow.pop %v1258
          %v1260 = vmul.f32 %v1204, 1.442695
          %v1261 = vpow.pop %v1260
          %v1262 = vmul.f32 %v1205, 1.442695
          %v1263 = vpow.pop %v1262
          %v1264 = vmul.f32 %v1206, 1.442695
          %v1265 = vpow.pop %v1264
          %v1266 = vmul.f32 %v1207, 1.442695
          %v1267 = vpow.pop %v1266
          %v1268 = vmul.f32 %v1208, 1.442695
          %v1269 = vpow.pop %v1268
          %v1270 = vmul.f32 %v1209, 1.442695
          %v1271 = vpow.pop %v1270
          %v1272 = vmul.f32 %v1210, 1.442695
          %v1273 = vpow.pop %v1272
          %v1274 = vmul.f32 %v1211, 1.442695
          %v1275 = vpow.pop %v1274
          %v1276 = vadd.f32 %v1213, 1.0
          %v1277 = vadd.f32 %v1215, 1.0
          %v1278 = vadd.f32 %v1217, 1.0
          %v1279 = vadd.f32 %v1219, 1.0
          %v1280 = vadd.f32 %v1221, 1.0
          %v1281 = vadd.f32 %v1223, 1.0
          %v1282 = vadd.f32 %v1225, 1.0
          %v1283 = vadd.f32 %v1227, 1.0
          %v1284 = vadd.f32 %v1229, 1.0
          %v1285 = vadd.f32 %v1231, 1.0
          %v1286 = vadd.f32 %v1233, 1.0
          %v1287 = vadd.f32 %v1235, 1.0
          %v1288 = vadd.f32 %v1237, 1.0
          %v1289 = vadd.f32 %v1239, 1.0
          %v1290 = vadd.f32 %v1241, 1.0
          %v1291 = vadd.f32 %v1243, 1.0
          %v1292 = vadd.f32 %v1245, 1.0
          %v1293 = vadd.f32 %v1247, 1.0
          %v1294 = vadd.f32 %v1249, 1.0
          %v1295 = vadd.f32 %v1251, 1.0
          %v1296 = vadd.f32 %v1253, 1.0
          %v1297 = vadd.f32 %v1255, 1.0
          %v1298 = vadd.f32 %v1257, 1.0
          %v1299 = vadd.f32 %v1259, 1.0
          %v1300 = vadd.f32 %v1261, 1.0
          %v1301 = vadd.f32 %v1263, 1.0
          %v1302 = vadd.f32 %v1265, 1.0
          %v1303 = vadd.f32 %v1267, 1.0
          %v1304 = vadd.f32 %v1269, 1.0
          %v1305 = vadd.f32 %v1271, 1.0
          %v1306 = vadd.f32 %v1273, 1.0
          %v1307 = vadd.f32 %v1275, 1.0
          %v1308 = vrcp.pop %v1276
          %v1309 = vmul.f32 1.0, %v1308
          %v1310 = vrcp.pop %v1277
          %v1311 = vmul.f32 1.0, %v1310
          %v1312 = vrcp.pop %v1278
          %v1313 = vmul.f32 1.0, %v1312
          %v1314 = vrcp.pop %v1279
          %v1315 = vmul.f32 1.0, %v1314
          %v1316 = vrcp.pop %v1280
          %v1317 = vmul.f32 1.0, %v1316
          %v1318 = vrcp.pop %v1281
          %v1319 = vmul.f32 1.0, %v1318
          %v1320 = vrcp.pop %v1282
          %v1321 = vmul.f32 1.0, %v1320
          %v1322 = vrcp.pop %v1283
          %v1323 = vmul.f32 1.0, %v1322
          %v1324 = vrcp.pop %v1284
          %v1325 = vmul.f32 1.0, %v1324
          %v1326 = vrcp.pop %v1285
          %v1327 = vmul.f32 1.0, %v1326
          %v1328 = vrcp.pop %v1286
          %v1329 = vmul.f32 1.0, %v1328
          %v1330 = vrcp.pop %v1287
          %v1331 = vmul.f32 1.0, %v1330
          %v1332 = vrcp.pop %v1288
          %v1333 = vmul.f32 1.0, %v1332
          %v1334 = vrcp.pop %v1289
          %v1335 = vmul.f32 1.0, %v1334
          %v1336 = vrcp.pop %v1290
          %v1337 = vmul.f32 1.0, %v1336
          %v1338 = vrcp.pop %v1291
          %v1339 = vmul.f32 1.0, %v1338
          %v1340 = vrcp.pop %v1292
          %v1341 = vmul.f32 1.0, %v1340
          %v1342 = vrcp.pop %v1293
          %v1343 = vmul.f32 1.0, %v1342
          %v1344 = vrcp.pop %v1294
          %v1345 = vmul.f32 1.0, %v1344
          %v1346 = vrcp.pop %v1295
          %v1347 = vmul.f32 1.0, %v1346
          %v1348 = vrcp.pop %v1296
          %v1349 = vmul.f32 1.0, %v1348
          %v1350 = vrcp.pop %v1297
          %v1351 = vmul.f32 1.0, %v1350
          %v1352 = vrcp.pop %v1298
          %v1353 = vmul.f32 1.0, %v1352
          %v1354 = vrcp.pop %v1299
          %v1355 = vmul.f32 1.0, %v1354
          %v1356 = vrcp.pop %v1300
          %v1357 = vmul.f32 1.0, %v1356
          %v1358 = vrcp.pop %v1301
          %v1359 = vmul.f32 1.0, %v1358
          %v1360 = vrcp.pop %v1302
          %v1361 = vmul.f32 1.0, %v1360
          %v1362 = vrcp.pop %v1303
          %v1363 = vmul.f32 1.0, %v1362
          %v1364 = vrcp.pop %v1304
          %v1365 = vmul.f32 1.0, %v1364
          %v1366 = vrcp.pop %v1305
          %v1367 = vmul.f32 1.0, %v1366
          %v1368 = vrcp.pop %v1306
          %v1369 = vmul.f32 1.0, %v1368
          %v1370 = vrcp.pop %v1307
          %v1371 = vmul.f32 1.0, %v1370
          %v1372 = vmul.f32 %v1325, %v257
          %v1373 = vmul.f32 %v1327, %v258
          %v1374 = vmul.f32 %v1329, %v259
          %v1375 = vmul.f32 %v1331, %v260
          %v1376 = vmul.f32 %v1333, %v261
          %v1377 = vmul.f32 %v1335, %v262
          %v1378 = vmul.f32 %v1337, %v263
          %v1379 = vmul.f32 %v1339, %v264
          %v1380 = vmul.f32 %v1309, %v1357
          %v1381 = vmul.f32 %v1311, %v1359
          %v1382 = vmul.f32 %v1313, %v1361
          %v1383 = vmul.f32 %v1315, %v1363
          %v1384 = vmul.f32 %v1317, %v1365
          %v1385 = vmul.f32 %v1319, %v1367
          %v1386 = vmul.f32 %v1321, %v1369
          %v1387 = vmul.f32 %v1323, %v1371
          %v1388 = vadd.f32 %v1372, %v1380
          %v1389 = vadd.f32 %v1373, %v1381
          %v1390 = vadd.f32 %v1374, %v1382
          %v1391 = vadd.f32 %v1375, %v1383
          %v1392 = vadd.f32 %v1376, %v1384
          %v1393 = vadd.f32 %v1377, %v1385
          %v1394 = vadd.f32 %v1378, %v1386
          %v1395 = vadd.f32 %v1379, %v1387
          %v1396 = vtanh.pop %v1388
          %v1397 = vtanh.pop %v1389
          %v1398 = vtanh.pop %v1390
          %v1399 = vtanh.pop %v1391
          %v1400 = vtanh.pop %v1392
          %v1401 = vtanh.pop %v1393
          %v1402 = vtanh.pop %v1394
          %v1403 = vtanh.pop %v1395
          %v1404 = vmul.f32 %v1341, %v1396
          %v1405 = vmul.f32 %v1343, %v1397
          %v1406 = vmul.f32 %v1345, %v1398
          %v1407 = vmul.f32 %v1347, %v1399
          %v1408 = vmul.f32 %v1349, %v1400
          %v1409 = vmul.f32 %v1351, %v1401
          %v1410 = vmul.f32 %v1353, %v1402
          %v1411 = vmul.f32 %v1355, %v1403
          %s1412 = smul.u32 %s244, 8
          %s1413 = smul.addr %s1412, 8
          %s1414 = scalar_lea.vmem %s234, %s1413 [#allocation8]
          %1415 = vst [vmem:[%s1414] sm:$0xff] %v1404
          %1416 = vst [vmem:[%s1414 + $0x8] sm:$0xff] %v1405
          %1417 = vst [vmem:[%s1414 + $0x10] sm:$0xff] %v1406
          %1418 = vst [vmem:[%s1414 + $0x18] sm:$0xff] %v1407
          %1419 = vst [vmem:[%s1414 + $0x20] sm:$0xff] %v1408
          %1420 = vst [vmem:[%s1414 + $0x28] sm:$0xff] %v1409
          %1421 = vst [vmem:[%s1414 + $0x30] sm:$0xff] %v1410
          %1422 = vst [vmem:[%s1414 + $0x38] sm:$0xff] %v1411
        $region45: #{tpu_custom_call.1} parent=31 // loop_footer
          %s248 = sadd.s32 1, %s244
        $region46: #{tpu_custom_call.1} parent=31 // loop_footer_branch
          %243 = sbr.rel target = $region42
        $region47: #{tpu_custom_call.1} parent=31 // loop_exit
          _
        %1423 = vst [vmem:[%s241] sm:$0xff] %v257
        %1424 = vst [vmem:[%s241 + $0x8] sm:$0xff] %v258
        %1425 = vst [vmem:[%s241 + $0x10] sm:$0xff] %v259
        %1426 = vst [vmem:[%s241 + $0x18] sm:$0xff] %v260
        %1427 = vst [vmem:[%s241 + $0x20] sm:$0xff] %v261
        %1428 = vst [vmem:[%s241 + $0x28] sm:$0xff] %v262
        %1429 = vst [vmem:[%s241 + $0x30] sm:$0xff] %v263
        %1430 = vst [vmem:[%s241 + $0x38] sm:$0xff] %v264
        %s1431 = sand.u32 %s102, 1
        %s1432 = scalar_lea.sflag [#allocation5], %s1431
        %s1433 = sand.u32 %s102, 1
        %s1434 = smul.addr %s1433, 512
        %s1435 = scalar_lea.vmem [#allocation8], %s1434
        %s1436 = sand.u32 %s128, 1
        %s1437 = scalar_lea.sflag [#allocation10], %s1436
        %s1438 = sand.u32 %s128, 1
        %s1439 = smul.addr %s1438, 64
        %s1440 = scalar_lea.vmem [#allocation9], %s1439
        // Predicated region
        $region48: #{tpu_custom_call.1} parent=31 // pred_check
          %p1441 = pneg %p112
        $region49: #{tpu_custom_call.1} parent=31 // pred_check_branch
          %1443 = sbr.rel (%p1441) target = $region51
        $region50: #{tpu_custom_call.1} parent=31 // pred_region
          %s1445 = ssub.s32 8192, 8192
          %1446 = vsyncadd %s1432, %s1445
          %s1447 = smul.addr %s26, 64
          %s1448 = smul.addr %s1447, 128
          %s1449 = scalar_lea.hbm %s3, %s1448
          %s1450 = sshll.u32 %s1435, 4
          %s1451 = int_to_ptr.vmem [resolvable:$true] %s1450
          %1456 = dma.vmem_to_hbm [thread:$0]  %s1451, 8192, %s1449, %s1432, 256, 256, 16
        $region51: #{tpu_custom_call.1} parent=31 // pred_fallthru
          _
        // Predicated region
        $region52: #{tpu_custom_call.1} parent=31 // pred_check
          %p1457 = pneg %p138
        $region53: #{tpu_custom_call.1} parent=31 // pred_check_branch
          %1459 = sbr.rel (%p1457) target = $region55
        $region54: #{tpu_custom_call.1} parent=31 // pred_region
          %s1461 = ssub.s32 1024, 1024
          %1462 = vsyncadd %s1437, %s1461
          %s1463 = smul.addr %s26, 8
          %s1464 = smul.addr %s1463, 128
          %s1465 = scalar_lea.hbm %s4, %s1464
          %s1466 = sshll.u32 %s1440, 4
          %s1467 = int_to_ptr.vmem [resolvable:$true] %s1466
          %1472 = dma.vmem_to_hbm [thread:$0]  %s1467, 1024, %s1465, %s1437, 256, 256, 16
        $region55: #{tpu_custom_call.1} parent=31 // pred_fallthru
          _
      $region32: #{tpu_custom_call.1} parent=5 // pred_fallthru
        _
      %p1473 = scmp.le.s32.totalorder 2, %s21
      // Predicated region
      $region56: #{tpu_custom_call.1} parent=5 // pred_check
        %p1474 = pneg %p1473
      $region57: #{tpu_custom_call.1} parent=5 // pred_check_branch
        %1476 = sbr.rel (%p1474) target = $region59
      $region58: #{tpu_custom_call.1} parent=5 // pred_region
        %s1477 = ssub.s32 %s21, 2
        // Predicated region
        $region60: #{tpu_custom_call.1} parent=58 // pred_check
          %p1478 = pneg %p118
        $region61: #{tpu_custom_call.1} parent=58 // pred_check_branch
          %1480 = sbr.rel (%p1478) target = $region63
        $region62: #{tpu_custom_call.1} parent=58 // pred_region
          %s1481 = sand.u32 %s103, 1
          %s1482 = scalar_lea.sflag [#allocation5], %s1481
          %s1483 = sand.u32 %s103, 1
          %s1484 = smul.addr %s1483, 512
          %s1485 = scalar_lea.vmem [#allocation8], %s1484
          %1486 = dma.done %s1482, 8192
        $region63: #{tpu_custom_call.1} parent=58 // pred_fallthru
          _
        // Predicated region
        $region64: #{tpu_custom_call.1} parent=58 // pred_check
          %p1487 = pneg %p144
        $region65: #{tpu_custom_call.1} parent=58 // pred_check_branch
          %1489 = sbr.rel (%p1487) target = $region67
        $region66: #{tpu_custom_call.1} parent=58 // pred_region
          %s1490 = sand.u32 %s129, 1
          %s1491 = scalar_lea.sflag [#allocation10], %s1490
          %s1492 = sand.u32 %s129, 1
          %s1493 = smul.addr %s1492, 64
          %s1494 = scalar_lea.vmem [#allocation9], %s1493
          %1495 = dma.done %s1491, 1024
        $region67: #{tpu_custom_call.1} parent=58 // pred_fallthru
          _
      $region59: #{tpu_custom_call.1} parent=5 // pred_fallthru
        _
    $region6: #{tpu_custom_call.1} parent=1 // loop_footer
      %s25 = sadd.s32 1, %s21
    $region7: #{tpu_custom_call.1} parent=1 // loop_footer_branch
      %20 = sbr.rel target = $region3
    $region8: #{tpu_custom_call.1} parent=1 // loop_exit
      _
    %1496 = vsyncpa [#allocation4], 1
    %s1497 = scalar_lea.sflag [#allocation4], 1
    %1498 = vsyncpa %s1497, 1
    %1499 = vsyncpa [#allocation7], 1
    %1500 = vsyncpa [#allocation5], 1
    %s1501 = scalar_lea.sflag [#allocation5], 1
    %1502 = vsyncpa %s1501, 1
    %1503 = vsyncpa [#allocation10], 1
    %s1504 = scalar_lea.sflag [#allocation10], 1
    %1505 = vsyncpa %s1504, 1

</llo_original>
